<compile_context>
chip_gen: v7x
topology: tpu7x:2x2x1
jax: 0.10.0
libtpu: 0.0.40
codegen_flags: <defaults>
</compile_context>

<pallas_src>
import jax
import jax.numpy as jnp
from jax import lax
from jax.experimental import pallas as pl
from jax.experimental.pallas import tpu as pltpu


MAXPAD = 2  # max(k // 2) over the four conv layers (k in {3, 5})


# ----------------------------- Pallas kernel --------------------------------

def _discriminator_kernel(x_ref, vec_ref, w1_ref, w2_ref, w3_ref, w4_ref,
                          out_ref, pad_ref):
    """Process TB batch elements per grid step.

    x_ref   : (TB, L, C_in)             input block
    vec_ref : (8, 128)                  packed [shift0, b1, shift1, b2, shift2, b3, shift3, b4]
    w*_ref  : (K, Cin, Cout)            BN-scale-folded conv weights
    out_ref : (TB, C_out)               per-element mean over L
    pad_ref : (TB, L + 2*MAXPAD, Cmax)  zero-halo scratch slab (VMEM)
    """
    TB, L, c_in = x_ref.shape
    M = TB * L
    c_pad = pad_ref.shape[2]

    # Re-zero only the halo rows (cheap); the interior is overwritten every layer.
    # Done unconditionally so it is correct even when the parallel grid axis is
    # sharded across TensorCores (each core has its own scratch instance).
    zero_halo = jnp.zeros((TB, MAXPAD, c_pad), jnp.float32)
    pad_ref[:, :MAXPAD, :] = zero_halo
    pad_ref[:, MAXPAD + L:MAXPAD + L + MAXPAD, :] = zero_halo

    def layer(h, w_ref, shift_row, bias_row, activate):
        # h: (M, cin) f32.  BN scale is already folded into w_ref; add the folded
        # additive shift here (before zero padding, matching PyTorch semantics).
        k, cin, cout = w_ref.shape
        p = k // 2
        h = h + vec_ref[shift_row:shift_row + 1, :cin]          # (1, cin) broadcast
        # Write the conv input into the slab interior; halos stay zero.
        pad_ref[:, MAXPAD:MAXPAD + L, :cin] = h.reshape(TB, L, cin)
        y = jnp.zeros((M, cout), jnp.float32)
        for t in range(k):                                      # static unroll, k in {3, 5}
            off = MAXPAD - p + t
            tap = pad_ref[:, off:off + L, :cin].reshape(M, cin)
            y = y + jnp.dot(tap.astype(w_ref.dtype), w_ref[t],
                            preferred_element_type=jnp.float32)
        y = y + vec_ref[bias_row:bias_row + 1, :cout]           # conv bias
        if activate:                                            # LeakyReLU(0.01); Dropout -> identity (eval)
            y = jnp.where(y > 0.0, y, 0.01 * y)
        return y

    h = x_ref[...].reshape(M, c_in).astype(jnp.float32)
    h = layer(h, w1_ref, 0, 1, True)
    h = layer(h, w2_ref, 2, 3, True)
    h = layer(h, w3_ref, 4, 5, True)
    h = layer(h, w4_ref, 6, 7, False)

    c_out = h.shape[1]
    out_ref[...] = jnp.mean(h.reshape(TB, L, c_out), axis=1)    # (TB, C_out)


# ------------------------------- wrapper -------------------------------------

def discriminator_forward(x, params, *, tb=None, mm_dtype=jnp.float32):
    """x: (B, L, input_dim) float32 -> (B, output_dim) float32.

    mm_dtype: dtype for the MXU matmul inputs (set jnp.bfloat16 on v6e/v7x for
    MXU-native throughput; f32 default keeps parity with the f32 reference).
    """
    B, L, c_in = x.shape
    c_out = params["w4"].shape[2]
    c_max_in = max(params["w1"].shape[1], params["w2"].shape[1],
                   params["w3"].shape[1], params["w4"].shape[1])

    # Pick TB so M = TB*L gives real MXU occupancy; keep multi-step grids
    # sublane-aligned (tb % 8 == 0) for unmasked output stores.
    if tb is None:
        tb = min(B, max(1, 256 // max(L, 1)))
    if tb < B:
        tb = 8 * pl.cdiv(tb, 8)
    b_pad = tb * pl.cdiv(B, tb)
    if b_pad != B:
        x = jnp.concatenate(
            [x, jnp.zeros((b_pad - B, L, c_in), x.dtype)], axis=0)

    vec = params["vec"]
    w1 = params["w1"].astype(mm_dtype)
    w2 = params["w2"].astype(mm_dtype)
    w3 = params["w3"].astype(mm_dtype)
    w4 = params["w4"].astype(mm_dtype)

    def const_spec(shape):
        nd = len(shape)
        return pl.BlockSpec(shape, lambda b, _n=nd: (0,) * _n)

    out = pl.pallas_call(
        _discriminator_kernel,
        out_shape=jax.ShapeDtypeStruct((b_pad, c_out), jnp.float32),
        grid_spec=pltpu.PrefetchScalarGridSpec(
            num_scalar_prefetch=0,
            grid=(b_pad // tb,),
            in_specs=[pl.BlockSpec((tb, L, c_in), lambda b: (b, 0, 0)),
                      const_spec(vec.shape),
                      const_spec(w1.shape), const_spec(w2.shape),
                      const_spec(w3.shape), const_spec(w4.shape)],
            out_specs=pl.BlockSpec((tb, c_out), lambda b: (b, 0)),
            scratch_shapes=[pltpu.VMEM((tb, L + 2 * MAXPAD, c_max_in),
                                       jnp.float32)],
        ),
        compiler_params=pltpu.CompilerParams(
            dimension_semantics=("parallel",)),
    )(x, vec, w1, w2, w3, w4)
    return out[:B]


# --------------------------- parameter construction ---------------------------

def make_params(key, input_dim, hidden_dim, output_dim):
    """Returns (kernel_params, torch_params).

    kernel_params: BN-scale-folded conv weights in (K, Cin, Cout) layout plus one
                   packed (8, 128) vector array [shift0, b1, shift1, b2, ...].
    torch_params : raw PyTorch-layout tensors for the pure-JAX reference.
    """
    eps = 1e-5

    def bn_raw(k, c):
        k1, k2, k3, k4 = jax.random.split(k, 4)
        gamma = jax.random.uniform(k1, (c,), jnp.float32, 0.5, 1.5)
        beta = jax.random.normal(k2, (c,), jnp.float32) * 0.1
        mean = jax.random.normal(k3, (c,), jnp.float32) * 0.1
        var = jax.random.uniform(k4, (c,), jnp.float32, 0.5, 1.5)
        scale = gamma / jnp.sqrt(var + eps)
        shift = beta - mean * scale
        return scale, shift

    def conv_raw(k, cin, cout, ksize):
        k1, k2 = jax.random.split(k)
        w = jax.random.normal(k1, (cout, cin, ksize), jnp.float32) * 0.1  # torch (O, I, K)
        b = jax.random.normal(k2, (cout,), jnp.float32) * 0.1
        return w, b

    keys = jax.random.split(key, 8)
    s0, t0 = bn_raw(keys[0], input_dim)
    w1, b1 = conv_raw(keys[1], input_dim, hidden_dim, 3)
    s1, t1 = bn_raw(keys[2], hidden_dim)
    w2, b2 = conv_raw(keys[3], hidden_dim, hidden_dim * 2, 5)
    s2, t2 = bn_raw(keys[4], hidden_dim * 2)
    w3, b3 = conv_raw(keys[5], hidden_dim * 2, hidden_dim, 5)
    s3, t3 = bn_raw(keys[6], hidden_dim)
    w4, b4 = conv_raw(keys[7], hidden_dim, output_dim, 3)

    def fold(w_torch, scale):
        # torch (Cout, Cin, K) -> kernel (K, Cin, Cout), BN scale folded on Cin.
        wk = jnp.transpose(w_torch, (2, 1, 0))
        return wk * scale[None, :, None]

    c_max = max(input_dim, hidden_dim, 2 * hidden_dim, output_dim)
    vcols = 128 * pl.cdiv(c_max, 128)
    vec = jnp.zeros((8, vcols), jnp.float32)
    rows = [t0 / s0, b1, t1 / s1, b2, t2 / s2, b3, t3 / s3, b4]
    for r, v in enumerate(rows):
        vec = vec.at[r, :v.shape[0]].set(v)

    kernel_params = dict(vec=vec,
                         w1=fold(w1, s0), w2=fold(w2, s1),
                         w3=fold(w3, s2), w4=fold(w4, s3))
    torch_params = dict(
        bn=[(s0, t0), (s1, t1), (s2, t2), (s3, t3)],
        conv=[(w1, b1, 3), (w2, b2, 5), (w3, b3, 5), (w4, b4, 3)])
    return kernel_params, torch_params


# ------------------------------ pure-JAX reference -----------------------------

def reference_forward(x, torch_params):
    """Mirrors the PyTorch module: NLC -> NCW, BN/Conv1d/LeakyReLU stack, mean over L."""
    h = jnp.transpose(x, (0, 2, 1))  # (B, C, L)

    def bn(h, s, t):
        return h * s.reshape(1, -1, 1) + t.reshape(1, -1, 1)

    def conv(h, w, b, k):
        y = lax.conv_general_dilated(
            h, w, window_strides=(1,), padding=[(k // 2, k // 2)],
            dimension_numbers=("NCW", "OIW", "NCW"))
        return y + b.reshape(1, -1, 1)

    def lrelu(h):
        return jnp.where(h > 0, h, 0.01 * h)

    for i in range(4):
        s, t = torch_params["bn"][i]
        w, b, k = torch_params["conv"][i]
        h = bn(h, s, t)
        h = conv(h, w, b, k)
        if i < 3:
            h = lrelu(h)
    h = jnp.transpose(h, (0, 2, 1))  # (B, L, C_out)
    return h.mean(axis=1)


# ----------------------------------- main --------------------------------------

if __name__ == "__main__":
    B, L = 2, 8
    input_dim, hidden_dim, output_dim = 8, 16, 4

    key = jax.random.PRNGKey(0)
    kx, kp = jax.random.split(key)
    x = jax.random.normal(kx, (B, L, input_dim), jnp.float32)

    kernel_params, torch_params = make_params(kp, input_dim, hidden_dim, output_dim)

    out = discriminator_forward(x, kernel_params)
    out = jax.block_until_ready(out)

    ref = reference_forward(x, torch_params)
    assert out.shape == (B, output_dim), out.shape
    assert jnp.allclose(out, ref, atol=1e-4, rtol=1e-4), (out, ref)

    print("KERNEL_OK")
</pallas_src>

<mosaic_0001>
module attributes {stable_mosaic.version = 11 : i64} {
  func.func @_discriminator_kernel(%arg0: i32, %arg1: memref<2x8x8xf32, #tpu.memory_space<vmem>>, %arg2: memref<8x128xf32, #tpu.memory_space<vmem>>, %arg3: memref<3x8x16xf32, #tpu.memory_space<vmem>>, %arg4: memref<5x16x32xf32, #tpu.memory_space<vmem>>, %arg5: memref<5x32x16xf32, #tpu.memory_space<vmem>>, %arg6: memref<3x16x4xf32, #tpu.memory_space<vmem>>, %arg7: memref<2x4xf32, #tpu.memory_space<vmem>>, %arg8: memref<2x12x32xf32, #tpu.memory_space<vmem>>) attributes {dimension_semantics = [#tpu.dimension_semantics<parallel>], iteration_bounds = array<i64: 1>, scalar_prefetch = 0 : i64, scratch_operands = 1 : i64, tpu.core_type = #tpu.core_type<tc>, window_params = [{transform_indices = @transform_0, window_bounds = array<i64: 2, 8, 8>}, {pipeline_mode = #tpu.pipeline_mode<synchronous>, transform_indices = @transform_1, window_bounds = array<i64: 8, 128>}, {pipeline_mode = #tpu.pipeline_mode<synchronous>, transform_indices = @transform_2, window_bounds = array<i64: 3, 8, 16>}, {pipeline_mode = #tpu.pipeline_mode<synchronous>, transform_indices = @transform_3, window_bounds = array<i64: 5, 16, 32>}, {pipeline_mode = #tpu.pipeline_mode<synchronous>, transform_indices = @transform_4, window_bounds = array<i64: 5, 32, 16>}, {pipeline_mode = #tpu.pipeline_mode<synchronous>, transform_indices = @transform_5, window_bounds = array<i64: 3, 16, 4>}, {transform_indices = @transform_6, window_bounds = array<i64: 2, 4>}]} {
    %cst = arith.constant 0.000000e+00 : f32
    %0 = vector.broadcast %cst : f32 to vector<2x2x32xf32>
    %c0 = arith.constant 0 : index
    %c0_0 = arith.constant 0 : index
    %c0_1 = arith.constant 0 : index
    %1 = vector.load %arg8[%c0, %c0_0, %c0_1] : memref<2x12x32xf32, #tpu.memory_space<vmem>>, vector<2x2x32xf32>
    tpu.vector_store %arg8[%c0, %c0_0, %c0_1], %0 {strides = array<i32>} : memref<2x12x32xf32, #tpu.memory_space<vmem>>, vector<2x2x32xf32>,
    %c0_2 = arith.constant 0 : index
    %c10 = arith.constant 10 : index
    %c0_3 = arith.constant 0 : index
    %2 = vector.load %arg8[%c0_2, %c10, %c0_3] : memref<2x12x32xf32, #tpu.memory_space<vmem>>, vector<2x2x32xf32>
    tpu.vector_store %arg8[%c0_2, %c10, %c0_3], %0 {strides = array<i32>} : memref<2x12x32xf32, #tpu.memory_space<vmem>>, vector<2x2x32xf32>,
    %c0_4 = arith.constant 0 : index
    %c0_5 = arith.constant 0 : index
    %c0_6 = arith.constant 0 : index
    %3 = vector.load %arg1[%c0_4, %c0_5, %c0_6] : memref<2x8x8xf32, #tpu.memory_space<vmem>>, vector<2x8x8xf32>
    %4 = vector.shape_cast %3 : vector<2x8x8xf32> to vector<16x8xf32>
    %c0_7 = arith.constant 0 : index
    %c0_8 = arith.constant 0 : index
    %5 = vector.load %arg2[%c0_7, %c0_8] : memref<8x128xf32, #tpu.memory_space<vmem>>, vector<1x8xf32>
    %6 = vector.broadcast %5 : vector<1x8xf32> to vector<16x8xf32>
    %7 = arith.addf %4, %6 : vector<16x8xf32>
    %8 = vector.shape_cast %7 : vector<16x8xf32> to vector<2x8x8xf32>
    %c0_9 = arith.constant 0 : index
    %c2 = arith.constant 2 : index
    %c0_10 = arith.constant 0 : index
    %9 = vector.load %arg8[%c0_9, %c2, %c0_10] : memref<2x12x32xf32, #tpu.memory_space<vmem>>, vector<2x8x8xf32>
    tpu.vector_store %arg8[%c0_9, %c2, %c0_10], %8 {strides = array<i32>} : memref<2x12x32xf32, #tpu.memory_space<vmem>>, vector<2x8x8xf32>,
    %cst_11 = arith.constant 0.000000e+00 : f32
    %10 = vector.broadcast %cst_11 : f32 to vector<16x16xf32>
    %c0_12 = arith.constant 0 : index
    %c1 = arith.constant 1 : index
    %c0_13 = arith.constant 0 : index
    %11 = vector.load %arg8[%c0_12, %c1, %c0_13] : memref<2x12x32xf32, #tpu.memory_space<vmem>>, vector<2x8x8xf32>
    %12 = vector.shape_cast %11 : vector<2x8x8xf32> to vector<16x8xf32>
    %c0_14 = arith.constant 0 : index
    %c0_15 = arith.constant 0 : index
    %c0_16 = arith.constant 0 : index
    %13 = vector.load %arg3[%c0_14, %c0_15, %c0_16] : memref<3x8x16xf32, #tpu.memory_space<vmem>>, vector<1x8x16xf32>
    %14 = vector.shape_cast %13 : vector<1x8x16xf32> to vector<8x16xf32>
    %cst_17 = arith.constant dense<0.000000e+00> : vector<16x16xf32>
    %15 = tpu.matmul %12, %14, %cst_17 {dimension_numbers = #tpu.dot_dimension_numbers<[1], [0], [0], [1], [0, 0, 1, 1], [], []>} : vector<16x8xf32>, vector<8x16xf32>, vector<16x16xf32> -> vector<16x16xf32>
    %16 = arith.addf %10, %15 : vector<16x16xf32>
    %c0_18 = arith.constant 0 : index
    %c2_19 = arith.constant 2 : index
    %c0_20 = arith.constant 0 : index
    %17 = vector.load %arg8[%c0_18, %c2_19, %c0_20] : memref<2x12x32xf32, #tpu.memory_space<vmem>>, vector<2x8x8xf32>
    %18 = vector.shape_cast %17 : vector<2x8x8xf32> to vector<16x8xf32>
    %c1_21 = arith.constant 1 : index
    %c0_22 = arith.constant 0 : index
    %c0_23 = arith.constant 0 : index
    %19 = vector.load %arg3[%c1_21, %c0_22, %c0_23] : memref<3x8x16xf32, #tpu.memory_space<vmem>>, vector<1x8x16xf32>
    %20 = vector.shape_cast %19 : vector<1x8x16xf32> to vector<8x16xf32>
    %cst_24 = arith.constant dense<0.000000e+00> : vector<16x16xf32>
    %21 = tpu.matmul %18, %20, %cst_24 {dimension_numbers = #tpu.dot_dimension_numbers<[1], [0], [0], [1], [0, 0, 1, 1], [], []>} : vector<16x8xf32>, vector<8x16xf32>, vector<16x16xf32> -> vector<16x16xf32>
    %22 = arith.addf %16, %21 : vector<16x16xf32>
    %c0_25 = arith.constant 0 : index
    %c3 = arith.constant 3 : index
    %c0_26 = arith.constant 0 : index
    %23 = vector.load %arg8[%c0_25, %c3, %c0_26] : memref<2x12x32xf32, #tpu.memory_space<vmem>>, vector<2x8x8xf32>
    %24 = vector.shape_cast %23 : vector<2x8x8xf32> to vector<16x8xf32>
    %c2_27 = arith.constant 2 : index
    %c0_28 = arith.constant 0 : index
    %c0_29 = arith.constant 0 : index
    %25 = vector.load %arg3[%c2_27, %c0_28, %c0_29] : memref<3x8x16xf32, #tpu.memory_space<vmem>>, vector<1x8x16xf32>
    %26 = vector.shape_cast %25 : vector<1x8x16xf32> to vector<8x16xf32>
    %cst_30 = arith.constant dense<0.000000e+00> : vector<16x16xf32>
    %27 = tpu.matmul %24, %26, %cst_30 {dimension_numbers = #tpu.dot_dimension_numbers<[1], [0], [0], [1], [0, 0, 1, 1], [], []>} : vector<16x8xf32>, vector<8x16xf32>, vector<16x16xf32> -> vector<16x16xf32>
    %28 = arith.addf %22, %27 : vector<16x16xf32>
    %c1_31 = arith.constant 1 : index
    %c0_32 = arith.constant 0 : index
    %29 = vector.load %arg2[%c1_31, %c0_32] : memref<8x128xf32, #tpu.memory_space<vmem>>, vector<1x16xf32>
    %30 = vector.broadcast %29 : vector<1x16xf32> to vector<16x16xf32>
    %31 = arith.addf %28, %30 : vector<16x16xf32>
    %cst_33 = arith.constant 0.000000e+00 : f32
    %32 = vector.broadcast %cst_33 : f32 to vector<16x16xf32>
    %33 = arith.cmpf ogt, %31, %32 : vector<16x16xf32>
    %cst_34 = arith.constant 0.00999999977 : f32
    %34 = vector.broadcast %cst_34 : f32 to vector<16x16xf32>
    %35 = arith.mulf %34, %31 : vector<16x16xf32>
    %36 = arith.select %33, %31, %35 : vector<16x16xi1>, vector<16x16xf32>
    %c2_35 = arith.constant 2 : index
    %c0_36 = arith.constant 0 : index
    %37 = vector.load %arg2[%c2_35, %c0_36] : memref<8x128xf32, #tpu.memory_space<vmem>>, vector<1x16xf32>
    %38 = vector.broadcast %37 : vector<1x16xf32> to vector<16x16xf32>
    %39 = arith.addf %36, %38 : vector<16x16xf32>
    %40 = vector.shape_cast %39 : vector<16x16xf32> to vector<2x8x16xf32>
    %c0_37 = arith.constant 0 : index
    %c2_38 = arith.constant 2 : index
    %c0_39 = arith.constant 0 : index
    %41 = vector.load %arg8[%c0_37, %c2_38, %c0_39] : memref<2x12x32xf32, #tpu.memory_space<vmem>>, vector<2x8x16xf32>
    tpu.vector_store %arg8[%c0_37, %c2_38, %c0_39], %40 {strides = array<i32>} : memref<2x12x32xf32, #tpu.memory_space<vmem>>, vector<2x8x16xf32>,
    %cst_40 = arith.constant 0.000000e+00 : f32
    %42 = vector.broadcast %cst_40 : f32 to vector<16x32xf32>
    %c0_41 = arith.constant 0 : index
    %c0_42 = arith.constant 0 : index
    %c0_43 = arith.constant 0 : index
    %43 = vector.load %arg8[%c0_41, %c0_42, %c0_43] : memref<2x12x32xf32, #tpu.memory_space<vmem>>, vector<2x8x16xf32>
    %44 = vector.shape_cast %43 : vector<2x8x16xf32> to vector<16x16xf32>
    %c0_44 = arith.constant 0 : index
    %c0_45 = arith.constant 0 : index
    %c0_46 = arith.constant 0 : index
    %45 = vector.load %arg4[%c0_44, %c0_45, %c0_46] : memref<5x16x32xf32, #tpu.memory_space<vmem>>, vector<1x16x32xf32>
    %46 = vector.shape_cast %45 : vector<1x16x32xf32> to vector<16x32xf32>
    %cst_47 = arith.constant dense<0.000000e+00> : vector<16x32xf32>
    %47 = tpu.matmul %44, %46, %cst_47 {dimension_numbers = #tpu.dot_dimension_numbers<[1], [0], [0], [1], [0, 0, 1, 1], [], []>} : vector<16x16xf32>, vector<16x32xf32>, vector<16x32xf32> -> vector<16x32xf32>
    %48 = arith.addf %42, %47 : vector<16x32xf32>
    %c0_48 = arith.constant 0 : index
    %c1_49 = arith.constant 1 : index
    %c0_50 = arith.constant 0 : index
    %49 = vector.load %arg8[%c0_48, %c1_49, %c0_50] : memref<2x12x32xf32, #tpu.memory_space<vmem>>, vector<2x8x16xf32>
    %50 = vector.shape_cast %49 : vector<2x8x16xf32> to vector<16x16xf32>
    %c1_51 = arith.constant 1 : index
    %c0_52 = arith.constant 0 : index
    %c0_53 = arith.constant 0 : index
    %51 = vector.load %arg4[%c1_51, %c0_52, %c0_53] : memref<5x16x32xf32, #tpu.memory_space<vmem>>, vector<1x16x32xf32>
    %52 = vector.shape_cast %51 : vector<1x16x32xf32> to vector<16x32xf32>
    %cst_54 = arith.constant dense<0.000000e+00> : vector<16x32xf32>
    %53 = tpu.matmul %50, %52, %cst_54 {dimension_numbers = #tpu.dot_dimension_numbers<[1], [0], [0], [1], [0, 0, 1, 1], [], []>} : vector<16x16xf32>, vector<16x32xf32>, vector<16x32xf32> -> vector<16x32xf32>
    %54 = arith.addf %48, %53 : vector<16x32xf32>
    %c0_55 = arith.constant 0 : index
    %c2_56 = arith.constant 2 : index
    %c0_57 = arith.constant 0 : index
    %55 = vector.load %arg8[%c0_55, %c2_56, %c0_57] : memref<2x12x32xf32, #tpu.memory_space<vmem>>, vector<2x8x16xf32>
    %56 = vector.shape_cast %55 : vector<2x8x16xf32> to vector<16x16xf32>
    %c2_58 = arith.constant 2 : index
    %c0_59 = arith.constant 0 : index
    %c0_60 = arith.constant 0 : index
    %57 = vector.load %arg4[%c2_58, %c0_59, %c0_60] : memref<5x16x32xf32, #tpu.memory_space<vmem>>, vector<1x16x32xf32>
    %58 = vector.shape_cast %57 : vector<1x16x32xf32> to vector<16x32xf32>
    %cst_61 = arith.constant dense<0.000000e+00> : vector<16x32xf32>
    %59 = tpu.matmul %56, %58, %cst_61 {dimension_numbers = #tpu.dot_dimension_numbers<[1], [0], [0], [1], [0, 0, 1, 1], [], []>} : vector<16x16xf32>, vector<16x32xf32>, vector<16x32xf32> -> vector<16x32xf32>
    %60 = arith.addf %54, %59 : vector<16x32xf32>
    %c0_62 = arith.constant 0 : index
    %c3_63 = arith.constant 3 : index
    %c0_64 = arith.constant 0 : index
    %61 = vector.load %arg8[%c0_62, %c3_63, %c0_64] : memref<2x12x32xf32, #tpu.memory_space<vmem>>, vector<2x8x16xf32>
    %62 = vector.shape_cast %61 : vector<2x8x16xf32> to vector<16x16xf32>
    %c3_65 = arith.constant 3 : index
    %c0_66 = arith.constant 0 : index
    %c0_67 = arith.constant 0 : index
    %63 = vector.load %arg4[%c3_65, %c0_66, %c0_67] : memref<5x16x32xf32, #tpu.memory_space<vmem>>, vector<1x16x32xf32>
    %64 = vector.shape_cast %63 : vector<1x16x32xf32> to vector<16x32xf32>
    %cst_68 = arith.constant dense<0.000000e+00> : vector<16x32xf32>
    %65 = tpu.matmul %62, %64, %cst_68 {dimension_numbers = #tpu.dot_dimension_numbers<[1], [0], [0], [1], [0, 0, 1, 1], [], []>} : vector<16x16xf32>, vector<16x32xf32>, vector<16x32xf32> -> vector<16x32xf32>
    %66 = arith.addf %60, %65 : vector<16x32xf32>
    %c0_69 = arith.constant 0 : index
    %c4 = arith.constant 4 : index
    %c0_70 = arith.constant 0 : index
    %67 = vector.load %arg8[%c0_69, %c4, %c0_70] : memref<2x12x32xf32, #tpu.memory_space<vmem>>, vector<2x8x16xf32>
    %68 = vector.shape_cast %67 : vector<2x8x16xf32> to vector<16x16xf32>
    %c4_71 = arith.constant 4 : index
    %c0_72 = arith.constant 0 : index
    %c0_73 = arith.constant 0 : index
    %69 = vector.load %arg4[%c4_71, %c0_72, %c0_73] : memref<5x16x32xf32, #tpu.memory_space<vmem>>, vector<1x16x32xf32>
    %70 = vector.shape_cast %69 : vector<1x16x32xf32> to vector<16x32xf32>
    %cst_74 = arith.constant dense<0.000000e+00> : vector<16x32xf32>
    %71 = tpu.matmul %68, %70, %cst_74 {dimension_numbers = #tpu.dot_dimension_numbers<[1], [0], [0], [1], [0, 0, 1, 1], [], []>} : vector<16x16xf32>, vector<16x32xf32>, vector<16x32xf32> -> vector<16x32xf32>
    %72 = arith.addf %66, %71 : vector<16x32xf32>
    %c3_75 = arith.constant 3 : index
    %c0_76 = arith.constant 0 : index
    %73 = vector.load %arg2[%c3_75, %c0_76] : memref<8x128xf32, #tpu.memory_space<vmem>>, vector<1x32xf32>
    %74 = vector.broadcast %73 : vector<1x32xf32> to vector<16x32xf32>
    %75 = arith.addf %72, %74 : vector<16x32xf32>
    %cst_77 = arith.constant 0.000000e+00 : f32
    %76 = vector.broadcast %cst_77 : f32 to vector<16x32xf32>
    %77 = arith.cmpf ogt, %75, %76 : vector<16x32xf32>
    %cst_78 = arith.constant 0.00999999977 : f32
    %78 = vector.broadcast %cst_78 : f32 to vector<16x32xf32>
    %79 = arith.mulf %78, %75 : vector<16x32xf32>
    %80 = arith.select %77, %75, %79 : vector<16x32xi1>, vector<16x32xf32>
    %c4_79 = arith.constant 4 : index
    %c0_80 = arith.constant 0 : index
    %81 = vector.load %arg2[%c4_79, %c0_80] : memref<8x128xf32, #tpu.memory_space<vmem>>, vector<1x32xf32>
    %82 = vector.broadcast %81 : vector<1x32xf32> to vector<16x32xf32>
    %83 = arith.addf %80, %82 : vector<16x32xf32>
    %84 = vector.shape_cast %83 : vector<16x32xf32> to vector<2x8x32xf32>
    %c0_81 = arith.constant 0 : index
    %c2_82 = arith.constant 2 : index
    %c0_83 = arith.constant 0 : index
    %85 = vector.load %arg8[%c0_81, %c2_82, %c0_83] : memref<2x12x32xf32, #tpu.memory_space<vmem>>, vector<2x8x32xf32>
    tpu.vector_store %arg8[%c0_81, %c2_82, %c0_83], %84 {strides = array<i32>} : memref<2x12x32xf32, #tpu.memory_space<vmem>>, vector<2x8x32xf32>,
    %cst_84 = arith.constant 0.000000e+00 : f32
    %86 = vector.broadcast %cst_84 : f32 to vector<16x16xf32>
    %c0_85 = arith.constant 0 : index
    %c0_86 = arith.constant 0 : index
    %c0_87 = arith.constant 0 : index
    %87 = vector.load %arg8[%c0_85, %c0_86, %c0_87] : memref<2x12x32xf32, #tpu.memory_space<vmem>>, vector<2x8x32xf32>
    %88 = vector.shape_cast %87 : vector<2x8x32xf32> to vector<16x32xf32>
    %c0_88 = arith.constant 0 : index
    %c0_89 = arith.constant 0 : index
    %c0_90 = arith.constant 0 : index
    %89 = vector.load %arg5[%c0_88, %c0_89, %c0_90] : memref<5x32x16xf32, #tpu.memory_space<vmem>>, vector<1x32x16xf32>
    %90 = vector.shape_cast %89 : vector<1x32x16xf32> to vector<32x16xf32>
    %cst_91 = arith.constant dense<0.000000e+00> : vector<16x16xf32>
    %91 = tpu.matmul %88, %90, %cst_91 {dimension_numbers = #tpu.dot_dimension_numbers<[1], [0], [0], [1], [0, 0, 1, 1], [], []>} : vector<16x32xf32>, vector<32x16xf32>, vector<16x16xf32> -> vector<16x16xf32>
    %92 = arith.addf %86, %91 : vector<16x16xf32>
    %c0_92 = arith.constant 0 : index
    %c1_93 = arith.constant 1 : index
    %c0_94 = arith.constant 0 : index
    %93 = vector.load %arg8[%c0_92, %c1_93, %c0_94] : memref<2x12x32xf32, #tpu.memory_space<vmem>>, vector<2x8x32xf32>
    %94 = vector.shape_cast %93 : vector<2x8x32xf32> to vector<16x32xf32>
    %c1_95 = arith.constant 1 : index
    %c0_96 = arith.constant 0 : index
    %c0_97 = arith.constant 0 : index
    %95 = vector.load %arg5[%c1_95, %c0_96, %c0_97] : memref<5x32x16xf32, #tpu.memory_space<vmem>>, vector<1x32x16xf32>
    %96 = vector.shape_cast %95 : vector<1x32x16xf32> to vector<32x16xf32>
    %cst_98 = arith.constant dense<0.000000e+00> : vector<16x16xf32>
    %97 = tpu.matmul %94, %96, %cst_98 {dimension_numbers = #tpu.dot_dimension_numbers<[1], [0], [0], [1], [0, 0, 1, 1], [], []>} : vector<16x32xf32>, vector<32x16xf32>, vector<16x16xf32> -> vector<16x16xf32>
    %98 = arith.addf %92, %97 : vector<16x16xf32>
    %c0_99 = arith.constant 0 : index
    %c2_100 = arith.constant 2 : index
    %c0_101 = arith.constant 0 : index
    %99 = vector.load %arg8[%c0_99, %c2_100, %c0_101] : memref<2x12x32xf32, #tpu.memory_space<vmem>>, vector<2x8x32xf32>
    %100 = vector.shape_cast %99 : vector<2x8x32xf32> to vector<16x32xf32>
    %c2_102 = arith.constant 2 : index
    %c0_103 = arith.constant 0 : index
    %c0_104 = arith.constant 0 : index
    %101 = vector.load %arg5[%c2_102, %c0_103, %c0_104] : memref<5x32x16xf32, #tpu.memory_space<vmem>>, vector<1x32x16xf32>
    %102 = vector.shape_cast %101 : vector<1x32x16xf32> to vector<32x16xf32>
    %cst_105 = arith.constant dense<0.000000e+00> : vector<16x16xf32>
    %103 = tpu.matmul %100, %102, %cst_105 {dimension_numbers = #tpu.dot_dimension_numbers<[1], [0], [0], [1], [0, 0, 1, 1], [], []>} : vector<16x32xf32>, vector<32x16xf32>, vector<16x16xf32> -> vector<16x16xf32>
    %104 = arith.addf %98, %103 : vector<16x16xf32>
    %c0_106 = arith.constant 0 : index
    %c3_107 = arith.constant 3 : index
    %c0_108 = arith.constant 0 : index
    %105 = vector.load %arg8[%c0_106, %c3_107, %c0_108] : memref<2x12x32xf32, #tpu.memory_space<vmem>>, vector<2x8x32xf32>
    %106 = vector.shape_cast %105 : vector<2x8x32xf32> to vector<16x32xf32>
    %c3_109 = arith.constant 3 : index
    %c0_110 = arith.constant 0 : index
    %c0_111 = arith.constant 0 : index
    %107 = vector.load %arg5[%c3_109, %c0_110, %c0_111] : memref<5x32x16xf32, #tpu.memory_space<vmem>>, vector<1x32x16xf32>
    %108 = vector.shape_cast %107 : vector<1x32x16xf32> to vector<32x16xf32>
    %cst_112 = arith.constant dense<0.000000e+00> : vector<16x16xf32>
    %109 = tpu.matmul %106, %108, %cst_112 {dimension_numbers = #tpu.dot_dimension_numbers<[1], [0], [0], [1], [0, 0, 1, 1], [], []>} : vector<16x32xf32>, vector<32x16xf32>, vector<16x16xf32> -> vector<16x16xf32>
    %110 = arith.addf %104, %109 : vector<16x16xf32>
    %c0_113 = arith.constant 0 : index
    %c4_114 = arith.constant 4 : index
    %c0_115 = arith.constant 0 : index
    %111 = vector.load %arg8[%c0_113, %c4_114, %c0_115] : memref<2x12x32xf32, #tpu.memory_space<vmem>>, vector<2x8x32xf32>
    %112 = vector.shape_cast %111 : vector<2x8x32xf32> to vector<16x32xf32>
    %c4_116 = arith.constant 4 : index
    %c0_117 = arith.constant 0 : index
    %c0_118 = arith.constant 0 : index
    %113 = vector.load %arg5[%c4_116, %c0_117, %c0_118] : memref<5x32x16xf32, #tpu.memory_space<vmem>>, vector<1x32x16xf32>
    %114 = vector.shape_cast %113 : vector<1x32x16xf32> to vector<32x16xf32>
    %cst_119 = arith.constant dense<0.000000e+00> : vector<16x16xf32>
    %115 = tpu.matmul %112, %114, %cst_119 {dimension_numbers = #tpu.dot_dimension_numbers<[1], [0], [0], [1], [0, 0, 1, 1], [], []>} : vector<16x32xf32>, vector<32x16xf32>, vector<16x16xf32> -> vector<16x16xf32>
    %116 = arith.addf %110, %115 : vector<16x16xf32>
    %c5 = arith.constant 5 : index
    %c0_120 = arith.constant 0 : index
    %117 = vector.load %arg2[%c5, %c0_120] : memref<8x128xf32, #tpu.memory_space<vmem>>, vector<1x16xf32>
    %118 = vector.broadcast %117 : vector<1x16xf32> to vector<16x16xf32>
    %119 = arith.addf %116, %118 : vector<16x16xf32>
    %cst_121 = arith.constant 0.000000e+00 : f32
    %120 = vector.broadcast %cst_121 : f32 to vector<16x16xf32>
    %121 = arith.cmpf ogt, %119, %120 : vector<16x16xf32>
    %cst_122 = arith.constant 0.00999999977 : f32
    %122 = vector.broadcast %cst_122 : f32 to vector<16x16xf32>
    %123 = arith.mulf %122, %119 : vector<16x16xf32>
    %124 = arith.select %121, %119, %123 : vector<16x16xi1>, vector<16x16xf32>
    %c6 = arith.constant 6 : index
    %c0_123 = arith.constant 0 : index
    %125 = vector.load %arg2[%c6, %c0_123] : memref<8x128xf32, #tpu.memory_space<vmem>>, vector<1x16xf32>
    %126 = vector.broadcast %125 : vector<1x16xf32> to vector<16x16xf32>
    %127 = arith.addf %124, %126 : vector<16x16xf32>
    %128 = vector.shape_cast %127 : vector<16x16xf32> to vector<2x8x16xf32>
    %c0_124 = arith.constant 0 : index
    %c2_125 = arith.constant 2 : index
    %c0_126 = arith.constant 0 : index
    %129 = vector.load %arg8[%c0_124, %c2_125, %c0_126] : memref<2x12x32xf32, #tpu.memory_space<vmem>>, vector<2x8x16xf32>
    tpu.vector_store %arg8[%c0_124, %c2_125, %c0_126], %128 {strides = array<i32>} : memref<2x12x32xf32, #tpu.memory_space<vmem>>, vector<2x8x16xf32>,
    %cst_127 = arith.constant 0.000000e+00 : f32
    %130 = vector.broadcast %cst_127 : f32 to vector<16x4xf32>
    %c0_128 = arith.constant 0 : index
    %c1_129 = arith.constant 1 : index
    %c0_130 = arith.constant 0 : index
    %131 = vector.load %arg8[%c0_128, %c1_129, %c0_130] : memref<2x12x32xf32, #tpu.memory_space<vmem>>, vector<2x8x16xf32>
    %132 = vector.shape_cast %131 : vector<2x8x16xf32> to vector<16x16xf32>
    %c0_131 = arith.constant 0 : index
    %c0_132 = arith.constant 0 : index
    %c0_133 = arith.constant 0 : index
    %133 = vector.load %arg6[%c0_131, %c0_132, %c0_133] : memref<3x16x4xf32, #tpu.memory_space<vmem>>, vector<1x16x4xf32>
    %134 = vector.shape_cast %133 : vector<1x16x4xf32> to vector<16x4xf32>
    %cst_134 = arith.constant dense<0.000000e+00> : vector<16x4xf32>
    %135 = tpu.matmul %132, %134, %cst_134 {dimension_numbers = #tpu.dot_dimension_numbers<[1], [0], [0], [1], [0, 0, 1, 1], [], []>} : vector<16x16xf32>, vector<16x4xf32>, vector<16x4xf32> -> vector<16x4xf32>
    %136 = arith.addf %130, %135 : vector<16x4xf32>
    %c0_135 = arith.constant 0 : index
    %c2_136 = arith.constant 2 : index
    %c0_137 = arith.constant 0 : index
    %137 = vector.load %arg8[%c0_135, %c2_136, %c0_137] : memref<2x12x32xf32, #tpu.memory_space<vmem>>, vector<2x8x16xf32>
    %138 = vector.shape_cast %137 : vector<2x8x16xf32> to vector<16x16xf32>
    %c1_138 = arith.constant 1 : index
    %c0_139 = arith.constant 0 : index
    %c0_140 = arith.constant 0 : index
    %139 = vector.load %arg6[%c1_138, %c0_139, %c0_140] : memref<3x16x4xf32, #tpu.memory_space<vmem>>, vector<1x16x4xf32>
    %140 = vector.shape_cast %139 : vector<1x16x4xf32> to vector<16x4xf32>
    %cst_141 = arith.constant dense<0.000000e+00> : vector<16x4xf32>
    %141 = tpu.matmul %138, %140, %cst_141 {dimension_numbers = #tpu.dot_dimension_numbers<[1], [0], [0], [1], [0, 0, 1, 1], [], []>} : vector<16x16xf32>, vector<16x4xf32>, vector<16x4xf32> -> vector<16x4xf32>
    %142 = arith.addf %136, %141 : vector<16x4xf32>
    %c0_142 = arith.constant 0 : index
    %c3_143 = arith.constant 3 : index
    %c0_144 = arith.constant 0 : index
    %143 = vector.load %arg8[%c0_142, %c3_143, %c0_144] : memref<2x12x32xf32, #tpu.memory_space<vmem>>, vector<2x8x16xf32>
    %144 = vector.shape_cast %143 : vector<2x8x16xf32> to vector<16x16xf32>
    %c2_145 = arith.constant 2 : index
    %c0_146 = arith.constant 0 : index
    %c0_147 = arith.constant 0 : index
    %145 = vector.load %arg6[%c2_145, %c0_146, %c0_147] : memref<3x16x4xf32, #tpu.memory_space<vmem>>, vector<1x16x4xf32>
    %146 = vector.shape_cast %145 : vector<1x16x4xf32> to vector<16x4xf32>
    %cst_148 = arith.constant dense<0.000000e+00> : vector<16x4xf32>
    %147 = tpu.matmul %144, %146, %cst_148 {dimension_numbers = #tpu.dot_dimension_numbers<[1], [0], [0], [1], [0, 0, 1, 1], [], []>} : vector<16x16xf32>, vector<16x4xf32>, vector<16x4xf32> -> vector<16x4xf32>
    %148 = arith.addf %142, %147 : vector<16x4xf32>
    %c7 = arith.constant 7 : index
    %c0_149 = arith.constant 0 : index
    %149 = vector.load %arg2[%c7, %c0_149] : memref<8x128xf32, #tpu.memory_space<vmem>>, vector<1x4xf32>
    %150 = vector.broadcast %149 : vector<1x4xf32> to vector<16x4xf32>
    %151 = arith.addf %148, %150 : vector<16x4xf32>
    %152 = vector.shape_cast %151 : vector<16x4xf32> to vector<2x8x4xf32>
    %cst_150 = arith.constant dense<0.000000e+00> : vector<2x4xf32>
    %153 = vector.multi_reduction <add>, %152, %cst_150 [1] : vector<2x8x4xf32> to vector<2x4xf32>
    %cst_151 = arith.constant 8.000000e+00 : f32
    %154 = vector.broadcast %cst_151 : f32 to vector<2x4xf32>
    %155 = arith.divf %153, %154 : vector<2x4xf32>
    %c0_152 = arith.constant 0 : index
    %c0_153 = arith.constant 0 : index
    %156 = vector.load %arg7[%c0_152, %c0_153] : memref<2x4xf32, #tpu.memory_space<vmem>>, vector<2x4xf32>
    tpu.vector_store %arg7[%c0_152, %c0_153], %155 {strides = array<i32>} : memref<2x4xf32, #tpu.memory_space<vmem>>, vector<2x4xf32>,
    return
  }
  func.func @transform_0(%arg0: i32) -> (i32, i32, i32) {
    %c0_i32 = arith.constant 0 : i32
    %c0_i32_0 = arith.constant 0 : i32
    %c0_i32_1 = arith.constant 0 : i32
    return %arg0, %c0_i32, %c0_i32_0 : i32, i32, i32
  }
  func.func @transform_1(%arg0: i32) -> (i32, i32) {
    %c0_i32 = arith.constant 0 : i32
    %c0_i32_0 = arith.constant 0 : i32
    %c0_i32_1 = arith.constant 0 : i32
    return %c0_i32, %c0_i32_0 : i32, i32
  }
  func.func @transform_2(%arg0: i32) -> (i32, i32, i32) {
    %c0_i32 = arith.constant 0 : i32
    %c0_i32_0 = arith.constant 0 : i32
    %c0_i32_1 = arith.constant 0 : i32
    %c0_i32_2 = arith.constant 0 : i32
    return %c0_i32, %c0_i32_0, %c0_i32_1 : i32, i32, i32
  }
  func.func @transform_3(%arg0: i32) -> (i32, i32, i32) {
    %c0_i32 = arith.constant 0 : i32
    %c0_i32_0 = arith.constant 0 : i32
    %c0_i32_1 = arith.constant 0 : i32
    %c0_i32_2 = arith.constant 0 : i32
    return %c0_i32, %c0_i32_0, %c0_i32_1 : i32, i32, i32
  }
  func.func @transform_4(%arg0: i32) -> (i32, i32, i32) {
    %c0_i32 = arith.constant 0 : i32
    %c0_i32_0 = arith.constant 0 : i32
    %c0_i32_1 = arith.constant 0 : i32
    %c0_i32_2 = arith.constant 0 : i32
    return %c0_i32, %c0_i32_0, %c0_i32_1 : i32, i32, i32
  }
  func.func @transform_5(%arg0: i32) -> (i32, i32, i32) {
    %c0_i32 = arith.constant 0 : i32
    %c0_i32_0 = arith.constant 0 : i32
    %c0_i32_1 = arith.constant 0 : i32
    %c0_i32_2 = arith.constant 0 : i32
    return %c0_i32, %c0_i32_0, %c0_i32_1 : i32, i32, i32
  }
  func.func @transform_6(%arg0: i32) -> (i32, i32) {
    %c0_i32 = arith.constant 0 : i32
    %c0_i32_0 = arith.constant 0 : i32
    return %arg0, %c0_i32 : i32, i32
  }
}

</mosaic_0001>

<llo_original>
// kernel: tpu_custom_call.1
$region0: #{tpu_custom_call.1}
  #allocation0 [shape = 'u32[]', space=smem, size = 0x4, offset = 0x4, fixed_abs, tag = 'smem constant byte address 0x4 - core index']
  #allocation1 [shape = 'u32[144,128]{1,0:T(1,128)}', space=vmem, size = 0x12000, scoped, tag = 'internal scratch']
  #allocation2 [shape = 'f32[2,12,32]{2,1,0:T(8,128)}', space=vmem, size = 0x4000, scoped, tag = 'scratch operand']
  %s0 = inlined_call_operand.vmem [shape: f32[2,8,8], index: 0, kind: input, shape index: {}]
  %s1 = inlined_call_operand.vmem [shape: f32[8,128], index: 1, kind: input, shape index: {}]
  %s2 = inlined_call_operand.vmem [shape: f32[3,8,16], index: 2, kind: input, shape index: {}]
  %s3 = inlined_call_operand.vmem [shape: f32[5,16,32], index: 3, kind: input, shape index: {}]
  %s4 = inlined_call_operand.vmem [shape: f32[5,32,16], index: 4, kind: input, shape index: {}]
  %s5 = inlined_call_operand.vmem [shape: f32[3,16,4], index: 5, kind: input, shape index: {}]
  %s6 = inlined_call_operand.hbm [shape: f32[2,4], index: 6, kind: output, shape index: {}]
  %s7 = sld [smem:[#allocation0]]
  $region34: #{tpu_custom_call.1} parent=0
    _
  %s9 = ssub.s32 1, %s7
  %s10 = scalar_select 0, %s9, %s7
  $region1: #{tpu_custom_call.1} parent=0
    #allocation3 [shape = 'u8[1024]{0}', space=vmem, size = 0x400, scoped, tag = 'output window, operand 0, single buffered']
    #allocation4 [shape = 's32[1]{0}', space=sflag, size = 0x4, scoped, tag = 'scoped memory for tpu_custom_call.1']
    %11 = vsyncpa [#allocation4], 0
    // Predicated region
    $region2: #{tpu_custom_call.1} parent=1 // pred_check
      _
    $region3: #{tpu_custom_call.1} parent=1 // pred_check_branch
      %13 = sbr.rel (0) target = $region5
    $region4: #{tpu_custom_call.1} parent=1 // pred_region
      _
    $region5: #{tpu_custom_call.1} parent=1 // pred_fallthru
      _
    // Predicated region
    $region6: #{tpu_custom_call.1} parent=1 // pred_check
      _
    $region7: #{tpu_custom_call.1} parent=1 // pred_check_branch
      %15 = sbr.rel (0) target = $region9
    $region8: #{tpu_custom_call.1} parent=1 // pred_region
      _
    $region9: #{tpu_custom_call.1} parent=1 // pred_fallthru
      _
    // Predicated region
    $region10: #{tpu_custom_call.1} parent=1 // pred_check
      _
    $region11: #{tpu_custom_call.1} parent=1 // pred_check_branch
      %17 = sbr.rel (0) target = $region13
    $region12: #{tpu_custom_call.1} parent=1 // pred_region
      _
    $region13: #{tpu_custom_call.1} parent=1 // pred_fallthru
      _
    // Predicated region
    $region14: #{tpu_custom_call.1} parent=1 // pred_check
      _
    $region15: #{tpu_custom_call.1} parent=1 // pred_check_branch
      %19 = sbr.rel (0) target = $region17
    $region16: #{tpu_custom_call.1} parent=1 // pred_region
      _
    $region17: #{tpu_custom_call.1} parent=1 // pred_fallthru
      _
    // Predicated region
    $region18: #{tpu_custom_call.1} parent=1 // pred_check
      _
    $region19: #{tpu_custom_call.1} parent=1 // pred_check_branch
      %21 = sbr.rel (0) target = $region21
    $region20: #{tpu_custom_call.1} parent=1 // pred_region
      _
    $region21: #{tpu_custom_call.1} parent=1 // pred_fallthru
      _
    // Predicated region
    $region22: #{tpu_custom_call.1} parent=1 // pred_check
      _
    $region23: #{tpu_custom_call.1} parent=1 // pred_check_branch
      %23 = sbr.rel (0) target = $region25
    $region24: #{tpu_custom_call.1} parent=1 // pred_region
      _
    $region25: #{tpu_custom_call.1} parent=1 // pred_fallthru
      _
    %vm24 = vcmask 254976
    %25 = vst.msk [vmem:[#allocation2] sm:$0x3] %vm24, 0.0
    %26 = vst.msk [vmem:[#allocation2 + $0x10] sm:$0x3] %vm24, 0.0
    %27 = vst.msk [vmem:[#allocation2 + $0xa] sm:$0x3] %vm24, 0.0
    %28 = vst.msk [vmem:[#allocation2 + $0x1a] sm:$0x3] %vm24, 0.0
    %v29 = vld [vmem:[%s0] sm:$0xff]
    %v30 = vld [vmem:[%s0 + $0x8] sm:$0xff]
    %v31 = vld [vmem:[%s1] sm:$0x1]
    %v32 = vlaneseq
    %v33 = vshrl.u32 %v32, 7
    %v34 = vsub.s32 0, %v33
    %v35 = vrot.slane %v31, %v34
    %v36 = vadd.f32 %v29, %v35
    %v37 = vadd.f32 %v30, %v35
    %vm38 = vcmask 64512
    %39 = vst.msk [vmem:[#allocation2 + $0x2] sm:$0xff] %vm38, %v36
    %40 = vst.msk [vmem:[#allocation2 + $0x12] sm:$0xff] %vm38, %v37
    %v41 = vld [vmem:[#allocation2 + $0x1] sm:$0xff]
    %v42 = vld [vmem:[#allocation2 + $0x11] sm:$0xff]
    %v43 = vld [vmem:[%s2] sm:$0xff]
    %v44 = vld [vmem:[#allocation2 + $0x2] sm:$0xff]
    %v45 = vld [vmem:[#allocation2 + $0x12] sm:$0xff]
    %s46 = scalar_lea.vmem %s2, 8
    %v47 = vld [vmem:[%s46] sm:$0xff]
    %v49 = vsel %vm38, %v44, 0
    %v52 = vsel %vm38, %v45, 0
    %54 = vmatprep.subr.mxu0 0.0
    %55 = vmatpush1.msra.mxu0 %v47
    %56 = vmatprep.subr.mxu0 0.0
    %57 = vmatpush1.msra.mxu0 0.0
    %58 = vmatprep.subr.mxu0 0.0
    %59 = vmatpush1.msra.mxu0 0.0
    %60 = vmatprep.subr.mxu0 0.0
    %61 = vmatpush1.msra.mxu0 0.0
    %62 = vmatprep.subr.mxu0 0.0
    %63 = vmatpush1.msra.mxu0 0.0
    %64 = vmatprep.subr.mxu0 0.0
    %65 = vmatpush1.msra.mxu0 0.0
    %66 = vmatprep.subr.mxu0 0.0
    %67 = vmatpush1.msra.mxu0 0.0
    %68 = vmatprep.subr.mxu0 0.0
    %69 = vmatpush1.msra.mxu0 0.0
    %70 = vmatprep.subr.mxu0 0.0
    %71 = vmatpush1.msra.mxu0 0.0
    %72 = vmatprep.subr.mxu0 0.0
    %73 = vmatpush1.msra.mxu0 0.0
    %74 = vmatprep.subr.mxu0 0.0
    %75 = vmatpush1.msra.mxu0 0.0
    %76 = vmatprep.subr.mxu0 0.0
    %77 = vmatpush1.msra.mxu0 0.0
    %78 = vmatprep.subr.mxu0 0.0
    %79 = vmatpush1.msra.mxu0 0.0
    %80 = vmatprep.subr.mxu0 0.0
    %81 = vmatpush1.msra.mxu0 0.0
    %82 = vmatprep.subr.mxu0 0.0
    %83 = vmatpush1.msra.mxu0 0.0
    %84 = vmatprep.subr.mxu0 0.0
    %85 = vmatpush1.msra.mxu0 0.0
    %86 = vmatprep.subr.mxu0 0.0
    %87 = vmatpush1.msra.mxu0 0.0
    %88 = vmatprep.subr.mxu0 0.0
    %89 = vmatpush1.msra.mxu0 0.0
    %90 = vmatprep.subr.mxu0 0.0
    %91 = vmatpush1.msra.mxu0 0.0
    %92 = vmatprep.subr.mxu0 0.0
    %93 = vmatpush1.msra.mxu0 0.0
    %94 = vmatprep.subr.mxu0 0.0
    %95 = vmatpush1.msra.mxu0 0.0
    %96 = vmatprep.subr.mxu0 0.0
    %97 = vmatpush1.msra.mxu0 0.0
    %98 = vmatprep.subr.mxu0 0.0
    %99 = vmatpush1.msra.mxu0 0.0
    %100 = vmatprep.subr.mxu0 0.0
    %101 = vmatpush1.msra.mxu0 0.0
    %102 = vmatprep.subr.mxu0 0.0
    %103 = vmatpush1.msra.mxu0 0.0
    %104 = vmatprep.subr.mxu0 0.0
    %105 = vmatpush1.msra.mxu0 0.0
    %106 = vmatprep.subr.mxu0 0.0
    %107 = vmatpush1.msra.mxu0 0.0
    %108 = vmatprep.subr.mxu0 0.0
    %109 = vmatpush1.msra.mxu0 0.0
    %110 = vmatprep.subr.mxu0 0.0
    %111 = vmatpush1.msra.mxu0 0.0
    %112 = vmatprep.subr.mxu0 0.0
    %113 = vmatpush1.msra.mxu0 0.0
    %114 = vmatprep.subr.mxu0 0.0
    %115 = vmatpush1.msra.mxu0 0.0
    %116 = vmatprep.subr.mxu0 0.0
    %117 = vmatpush1.msra.mxu0 0.0
    %118 = vmatprep.mubr.f32.mxu0 0.0
    %119 = vmatmul.mubr.f32.gmra.mrb[0].mxu0 %v49
    %v120 = vpop.f32.mrb[0].mxu0
    %v121 = vadd.f32 0.0, %v120
    %v122 = vpop.f32.mrb[0].mxu0
    %123 = vmatprep.mubr.f32.mxu0 0.0
    %124 = vmatmul.mubr.f32.gmra.mrb[0].mxu0 %v52
    %v125 = vpop.f32.mrb[0].mxu0
    %v126 = vadd.f32 0.0, %v125
    %v127 = vpop.f32.mrb[0].mxu0
    %128 = vdwg.mxu0
    %v130 = vsel %vm38, %v41, 0
    %v133 = vsel %vm38, %v42, 0
    %135 = vmatprep.subr.mxu0 0.0
    %136 = vmatpush1.msra.mxu0 %v43
    %137 = vmatprep.subr.mxu0 0.0
    %138 = vmatpush1.msra.mxu0 0.0
    %139 = vmatprep.subr.mxu0 0.0
    %140 = vmatpush1.msra.mxu0 0.0
    %141 = vmatprep.subr.mxu0 0.0
    %142 = vmatpush1.msra.mxu0 0.0
    %143 = vmatprep.subr.mxu0 0.0
    %144 = vmatpush1.msra.mxu0 0.0
    %145 = vmatprep.subr.mxu0 0.0
    %146 = vmatpush1.msra.mxu0 0.0
    %147 = vmatprep.subr.mxu0 0.0
    %148 = vmatpush1.msra.mxu0 0.0
    %149 = vmatprep.subr.mxu0 0.0
    %150 = vmatpush1.msra.mxu0 0.0
    %151 = vmatprep.subr.mxu0 0.0
    %152 = vmatpush1.msra.mxu0 0.0
    %153 = vmatprep.subr.mxu0 0.0
    %154 = vmatpush1.msra.mxu0 0.0
    %155 = vmatprep.subr.mxu0 0.0
    %156 = vmatpush1.msra.mxu0 0.0
    %157 = vmatprep.subr.mxu0 0.0
    %158 = vmatpush1.msra.mxu0 0.0
    %159 = vmatprep.subr.mxu0 0.0
    %160 = vmatpush1.msra.mxu0 0.0
    %161 = vmatprep.subr.mxu0 0.0
    %162 = vmatpush1.msra.mxu0 0.0
    %163 = vmatprep.subr.mxu0 0.0
    %164 = vmatpush1.msra.mxu0 0.0
    %165 = vmatprep.subr.mxu0 0.0
    %166 = vmatpush1.msra.mxu0 0.0
    %167 = vmatprep.subr.mxu0 0.0
    %168 = vmatpush1.msra.mxu0 0.0
    %169 = vmatprep.subr.mxu0 0.0
    %170 = vmatpush1.msra.mxu0 0.0
    %171 = vmatprep.subr.mxu0 0.0
    %172 = vmatpush1.msra.mxu0 0.0
    %173 = vmatprep.subr.mxu0 0.0
    %174 = vmatpush1.msra.mxu0 0.0
    %175 = vmatprep.subr.mxu0 0.0
    %176 = vmatpush1.msra.mxu0 0.0
    %177 = vmatprep.subr.mxu0 0.0
    %178 = vmatpush1.msra.mxu0 0.0
    %179 = vmatprep.subr.mxu0 0.0
    %180 = vmatpush1.msra.mxu0 0.0
    %181 = vmatprep.subr.mxu0 0.0
    %182 = vmatpush1.msra.mxu0 0.0
    %183 = vmatprep.subr.mxu0 0.0
    %184 = vmatpush1.msra.mxu0 0.0
    %185 = vmatprep.subr.mxu0 0.0
    %186 = vmatpush1.msra.mxu0 0.0
    %187 = vmatprep.subr.mxu0 0.0
    %188 = vmatpush1.msra.mxu0 0.0
    %189 = vmatprep.subr.mxu0 0.0
    %190 = vmatpush1.msra.mxu0 0.0
    %191 = vmatprep.subr.mxu0 0.0
    %192 = vmatpush1.msra.mxu0 0.0
    %193 = vmatprep.subr.mxu0 0.0
    %194 = vmatpush1.msra.mxu0 0.0
    %195 = vmatprep.subr.mxu0 0.0
    %196 = vmatpush1.msra.mxu0 0.0
    %197 = vmatprep.subr.mxu0 0.0
    %198 = vmatpush1.msra.mxu0 0.0
    %199 = vmatprep.mubr.f32.mxu0 0.0
    %200 = vmatmul.mubr.f32.gmra.mrb[0].mxu0 %v130
    %v201 = vpop.f32.mrb[0].mxu0
    %v202 = vadd.f32 %v121, %v201
    %v203 = vpop.f32.mrb[0].mxu0
    %204 = vmatprep.mubr.f32.mxu0 0.0
    %205 = vmatmul.mubr.f32.gmra.mrb[0].mxu0 %v133
    %v206 = vpop.f32.mrb[0].mxu0
    %v207 = vadd.f32 %v126, %v206
    %v208 = vpop.f32.mrb[0].mxu0
    %209 = vdwg.mxu0
    %v210 = vld [vmem:[#allocation2 + $0x3] sm:$0xff]
    %v211 = vld [vmem:[#allocation2 + $0x13] sm:$0xff]
    %s212 = scalar_lea.vmem %s2, 16
    %v213 = vld [vmem:[%s212] sm:$0xff]
    %v215 = vsel %vm38, %v210, 0
    %v218 = vsel %vm38, %v211, 0
    %220 = vmatprep.subr.mxu0 0.0
    %221 = vmatpush1.msra.mxu0 %v213
    %222 = vmatprep.subr.mxu0 0.0
    %223 = vmatpush1.msra.mxu0 0.0
    %224 = vmatprep.subr.mxu0 0.0
    %225 = vmatpush1.msra.mxu0 0.0
    %226 = vmatprep.subr.mxu0 0.0
    %227 = vmatpush1.msra.mxu0 0.0
    %228 = vmatprep.subr.mxu0 0.0
    %229 = vmatpush1.msra.mxu0 0.0
    %230 = vmatprep.subr.mxu0 0.0
    %231 = vmatpush1.msra.mxu0 0.0
    %232 = vmatprep.subr.mxu0 0.0
    %233 = vmatpush1.msra.mxu0 0.0
    %234 = vmatprep.subr.mxu0 0.0
    %235 = vmatpush1.msra.mxu0 0.0
    %236 = vmatprep.subr.mxu0 0.0
    %237 = vmatpush1.msra.mxu0 0.0
    %238 = vmatprep.subr.mxu0 0.0
    %239 = vmatpush1.msra.mxu0 0.0
    %240 = vmatprep.subr.mxu0 0.0
    %241 = vmatpush1.msra.mxu0 0.0
    %242 = vmatprep.subr.mxu0 0.0
    %243 = vmatpush1.msra.mxu0 0.0
    %244 = vmatprep.subr.mxu0 0.0
    %245 = vmatpush1.msra.mxu0 0.0
    %246 = vmatprep.subr.mxu0 0.0
    %247 = vmatpush1.msra.mxu0 0.0
    %248 = vmatprep.subr.mxu0 0.0
    %249 = vmatpush1.msra.mxu0 0.0
    %250 = vmatprep.subr.mxu0 0.0
    %251 = vmatpush1.msra.mxu0 0.0
    %252 = vmatprep.subr.mxu0 0.0
    %253 = vmatpush1.msra.mxu0 0.0
    %254 = vmatprep.subr.mxu0 0.0
    %255 = vmatpush1.msra.mxu0 0.0
    %256 = vmatprep.subr.mxu0 0.0
    %257 = vmatpush1.msra.mxu0 0.0
    %258 = vmatprep.subr.mxu0 0.0
    %259 = vmatpush1.msra.mxu0 0.0
    %260 = vmatprep.subr.mxu0 0.0
    %261 = vmatpush1.msra.mxu0 0.0
    %262 = vmatprep.subr.mxu0 0.0
    %263 = vmatpush1.msra.mxu0 0.0
    %264 = vmatprep.subr.mxu0 0.0
    %265 = vmatpush1.msra.mxu0 0.0
    %266 = vmatprep.subr.mxu0 0.0
    %267 = vmatpush1.msra.mxu0 0.0
    %268 = vmatprep.subr.mxu0 0.0
    %269 = vmatpush1.msra.mxu0 0.0
    %270 = vmatprep.subr.mxu0 0.0
    %271 = vmatpush1.msra.mxu0 0.0
    %272 = vmatprep.subr.mxu0 0.0
    %273 = vmatpush1.msra.mxu0 0.0
    %274 = vmatprep.subr.mxu0 0.0
    %275 = vmatpush1.msra.mxu0 0.0
    %276 = vmatprep.subr.mxu0 0.0
    %277 = vmatpush1.msra.mxu0 0.0
    %278 = vmatprep.subr.mxu0 0.0
    %279 = vmatpush1.msra.mxu0 0.0
    %280 = vmatprep.subr.mxu0 0.0
    %281 = vmatpush1.msra.mxu0 0.0
    %282 = vmatprep.subr.mxu0 0.0
    %283 = vmatpush1.msra.mxu0 0.0
    %284 = vmatprep.mubr.f32.mxu0 0.0
    %285 = vmatmul.mubr.f32.gmra.mrb[0].mxu0 %v215
    %v286 = vpop.f32.mrb[0].mxu0
    %v287 = vadd.f32 0.0, %v286
    %v288 = vpop.f32.mrb[0].mxu0
    %289 = vmatprep.mubr.f32.mxu0 0.0
    %290 = vmatmul.mubr.f32.gmra.mrb[0].mxu0 %v218
    %v291 = vpop.f32.mrb[0].mxu0
    %v292 = vadd.f32 0.0, %v291
    %v293 = vpop.f32.mrb[0].mxu0
    %294 = vdwg.mxu0
    %v295 = vadd.f32 %v202, %v287
    %v296 = vadd.f32 %v207, %v292
    %v297 = vld [vmem:[%s1 + $0x1] sm:$0x1]
    %v298 = vlaneseq
    %v299 = vshrl.u32 %v298, 7
    %v300 = vsub.s32 0, %v299
    %v301 = vrot.slane %v297, %v300
    %v302 = vadd.f32 %v295, %v301
    %v303 = vadd.f32 %v296, %v301
    %vm304 = vcmp.gt.f32.partialorder %v302, 0.0
    %vm305 = vcmp.gt.f32.partialorder %v303, 0.0
    %v306 = vmul.f32 %v302, 0.01
    %v307 = vmul.f32 %v303, 0.01
    %v308 = vsel %vm304, %v302, %v306
    %v309 = vsel %vm305, %v303, %v307
    %v310 = vld [vmem:[%s1 + $0x2] sm:$0x1]
    %v311 = vlaneseq
    %v312 = vshrl.u32 %v311, 7
    %v313 = vsub.s32 0, %v312
    %v314 = vrot.slane %v310, %v313
    %v315 = vadd.f32 %v308, %v314
    %v316 = vadd.f32 %v309, %v314
    %vm317 = vcmask 130048
    %318 = vst.msk [vmem:[#allocation2 + $0x2] sm:$0xff] %vm317, %v315
    %319 = vst.msk [vmem:[#allocation2 + $0x12] sm:$0xff] %vm317, %v316
    %v320 = vld [vmem:[#allocation2] sm:$0xff]
    %v321 = vld [vmem:[#allocation2 + $0x10] sm:$0xff]
    %v322 = vld [vmem:[%s3] sm:$0xff]
    %v323 = vld [vmem:[%s3 + $0x8] sm:$0xff]
    %v324 = vld [vmem:[#allocation2 + $0x1] sm:$0xff]
    %v325 = vld [vmem:[#allocation2 + $0x11] sm:$0xff]
    %s326 = scalar_lea.vmem %s3, 16
    %v327 = vld [vmem:[%s326] sm:$0xff]
    %v328 = vld [vmem:[%s326 + $0x8] sm:$0xff]
    %v330 = vsel %vm317, %v324, 0
    %v333 = vsel %vm317, %v325, 0
    %335 = vmatprep.subr.mxu0 0.0
    %336 = vmatpush1.msra.mxu0 %v327
    %337 = vmatprep.subr.mxu0 0.0
    %338 = vmatpush1.msra.mxu0 %v328
    %339 = vmatprep.subr.mxu0 0.0
    %340 = vmatpush1.msra.mxu0 0.0
    %341 = vmatprep.subr.mxu0 0.0
    %342 = vmatpush1.msra.mxu0 0.0
    %343 = vmatprep.subr.mxu0 0.0
    %344 = vmatpush1.msra.mxu0 0.0
    %345 = vmatprep.subr.mxu0 0.0
    %346 = vmatpush1.msra.mxu0 0.0
    %347 = vmatprep.subr.mxu0 0.0
    %348 = vmatpush1.msra.mxu0 0.0
    %349 = vmatprep.subr.mxu0 0.0
    %350 = vmatpush1.msra.mxu0 0.0
    %351 = vmatprep.subr.mxu0 0.0
    %352 = vmatpush1.msra.mxu0 0.0
    %353 = vmatprep.subr.mxu0 0.0
    %354 = vmatpush1.msra.mxu0 0.0
    %355 = vmatprep.subr.mxu0 0.0
    %356 = vmatpush1.msra.mxu0 0.0
    %357 = vmatprep.subr.mxu0 0.0
    %358 = vmatpush1.msra.mxu0 0.0
    %359 = vmatprep.subr.mxu0 0.0
    %360 = vmatpush1.msra.mxu0 0.0
    %361 = vmatprep.subr.mxu0 0.0
    %362 = vmatpush1.msra.mxu0 0.0
    %363 = vmatprep.subr.mxu0 0.0
    %364 = vmatpush1.msra.mxu0 0.0
    %365 = vmatprep.subr.mxu0 0.0
    %366 = vmatpush1.msra.mxu0 0.0
    %367 = vmatprep.subr.mxu0 0.0
    %368 = vmatpush1.msra.mxu0 0.0
    %369 = vmatprep.subr.mxu0 0.0
    %370 = vmatpush1.msra.mxu0 0.0
    %371 = vmatprep.subr.mxu0 0.0
    %372 = vmatpush1.msra.mxu0 0.0
    %373 = vmatprep.subr.mxu0 0.0
    %374 = vmatpush1.msra.mxu0 0.0
    %375 = vmatprep.subr.mxu0 0.0
    %376 = vmatpush1.msra.mxu0 0.0
    %377 = vmatprep.subr.mxu0 0.0
    %378 = vmatpush1.msra.mxu0 0.0
    %379 = vmatprep.subr.mxu0 0.0
    %380 = vmatpush1.msra.mxu0 0.0
    %381 = vmatprep.subr.mxu0 0.0
    %382 = vmatpush1.msra.mxu0 0.0
    %383 = vmatprep.subr.mxu0 0.0
    %384 = vmatpush1.msra.mxu0 0.0
    %385 = vmatprep.subr.mxu0 0.0
    %386 = vmatpush1.msra.mxu0 0.0
    %387 = vmatprep.subr.mxu0 0.0
    %388 = vmatpush1.msra.mxu0 0.0
    %389 = vmatprep.subr.mxu0 0.0
    %390 = vmatpush1.msra.mxu0 0.0
    %391 = vmatprep.subr.mxu0 0.0
    %392 = vmatpush1.msra.mxu0 0.0
    %393 = vmatprep.subr.mxu0 0.0
    %394 = vmatpush1.msra.mxu0 0.0
    %395 = vmatprep.subr.mxu0 0.0
    %396 = vmatpush1.msra.mxu0 0.0
    %397 = vmatprep.subr.mxu0 0.0
    %398 = vmatpush1.msra.mxu0 0.0
    %399 = vmatprep.mubr.f32.mxu0 0.0
    %400 = vmatmul.mubr.f32.gmra.mrb[0].mxu0 %v330
    %v401 = vpop.f32.mrb[0].mxu0
    %v402 = vadd.f32 0.0, %v401
    %v403 = vpop.f32.mrb[0].mxu0
    %404 = vmatprep.mubr.f32.mxu0 0.0
    %405 = vmatmul.mubr.f32.gmra.mrb[0].mxu0 %v333
    %v406 = vpop.f32.mrb[0].mxu0
    %v407 = vadd.f32 0.0, %v406
    %v408 = vpop.f32.mrb[0].mxu0
    %409 = vdwg.mxu0
    %v411 = vsel %vm317, %v320, 0
    %v414 = vsel %vm317, %v321, 0
    %416 = vmatprep.subr.mxu0 0.0
    %417 = vmatpush1.msra.mxu0 %v322
    %418 = vmatprep.subr.mxu0 0.0
    %419 = vmatpush1.msra.mxu0 %v323
    %420 = vmatprep.subr.mxu0 0.0
    %421 = vmatpush1.msra.mxu0 0.0
    %422 = vmatprep.subr.mxu0 0.0
    %423 = vmatpush1.msra.mxu0 0.0
    %424 = vmatprep.subr.mxu0 0.0
    %425 = vmatpush1.msra.mxu0 0.0
    %426 = vmatprep.subr.mxu0 0.0
    %427 = vmatpush1.msra.mxu0 0.0
    %428 = vmatprep.subr.mxu0 0.0
    %429 = vmatpush1.msra.mxu0 0.0
    %430 = vmatprep.subr.mxu0 0.0
    %431 = vmatpush1.msra.mxu0 0.0
    %432 = vmatprep.subr.mxu0 0.0
    %433 = vmatpush1.msra.mxu0 0.0
    %434 = vmatprep.subr.mxu0 0.0
    %435 = vmatpush1.msra.mxu0 0.0
    %436 = vmatprep.subr.mxu0 0.0
    %437 = vmatpush1.msra.mxu0 0.0
    %438 = vmatprep.subr.mxu0 0.0
    %439 = vmatpush1.msra.mxu0 0.0
    %440 = vmatprep.subr.mxu0 0.0
    %441 = vmatpush1.msra.mxu0 0.0
    %442 = vmatprep.subr.mxu0 0.0
    %443 = vmatpush1.msra.mxu0 0.0
    %444 = vmatprep.subr.mxu0 0.0
    %445 = vmatpush1.msra.mxu0 0.0
    %446 = vmatprep.subr.mxu0 0.0
    %447 = vmatpush1.msra.mxu0 0.0
    %448 = vmatprep.subr.mxu0 0.0
    %449 = vmatpush1.msra.mxu0 0.0
    %450 = vmatprep.subr.mxu0 0.0
    %451 = vmatpush1.msra.mxu0 0.0
    %452 = vmatprep.subr.mxu0 0.0
    %453 = vmatpush1.msra.mxu0 0.0
    %454 = vmatprep.subr.mxu0 0.0
    %455 = vmatpush1.msra.mxu0 0.0
    %456 = vmatprep.subr.mxu0 0.0
    %457 = vmatpush1.msra.mxu0 0.0
    %458 = vmatprep.subr.mxu0 0.0
    %459 = vmatpush1.msra.mxu0 0.0
    %460 = vmatprep.subr.mxu0 0.0
    %461 = vmatpush1.msra.mxu0 0.0
    %462 = vmatprep.subr.mxu0 0.0
    %463 = vmatpush1.msra.mxu0 0.0
    %464 = vmatprep.subr.mxu0 0.0
    %465 = vmatpush1.msra.mxu0 0.0
    %466 = vmatprep.subr.mxu0 0.0
    %467 = vmatpush1.msra.mxu0 0.0
    %468 = vmatprep.subr.mxu0 0.0
    %469 = vmatpush1.msra.mxu0 0.0
    %470 = vmatprep.subr.mxu0 0.0
    %471 = vmatpush1.msra.mxu0 0.0
    %472 = vmatprep.subr.mxu0 0.0
    %473 = vmatpush1.msra.mxu0 0.0
    %474 = vmatprep.subr.mxu0 0.0
    %475 = vmatpush1.msra.mxu0 0.0
    %476 = vmatprep.subr.mxu0 0.0
    %477 = vmatpush1.msra.mxu0 0.0
    %478 = vmatprep.subr.mxu0 0.0
    %479 = vmatpush1.msra.mxu0 0.0
    %480 = vmatprep.mubr.f32.mxu0 0.0
    %481 = vmatmul.mubr.f32.gmra.mrb[0].mxu0 %v411
    %v482 = vpop.f32.mrb[0].mxu0
    %v483 = vadd.f32 %v402, %v482
    %v484 = vpop.f32.mrb[0].mxu0
    %485 = vmatprep.mubr.f32.mxu0 0.0
    %486 = vmatmul.mubr.f32.gmra.mrb[0].mxu0 %v414
    %v487 = vpop.f32.mrb[0].mxu0
    %v488 = vadd.f32 %v407, %v487
    %v489 = vpop.f32.mrb[0].mxu0
    %490 = vdwg.mxu0
    %v491 = vld [vmem:[#allocation2 + $0x2] sm:$0xff]
    %v492 = vld [vmem:[#allocation2 + $0x12] sm:$0xff]
    %s493 = scalar_lea.vmem %s3, 32
    %v494 = vld [vmem:[%s493] sm:$0xff]
    %v495 = vld [vmem:[%s493 + $0x8] sm:$0xff]
    %v497 = vsel %vm317, %v491, 0
    %v500 = vsel %vm317, %v492, 0
    %502 = vmatprep.subr.mxu0 0.0
    %503 = vmatpush1.msra.mxu0 %v494
    %504 = vmatprep.subr.mxu0 0.0
    %505 = vmatpush1.msra.mxu0 %v495
    %506 = vmatprep.subr.mxu0 0.0
    %507 = vmatpush1.msra.mxu0 0.0
    %508 = vmatprep.subr.mxu0 0.0
    %509 = vmatpush1.msra.mxu0 0.0
    %510 = vmatprep.subr.mxu0 0.0
    %511 = vmatpush1.msra.mxu0 0.0
    %512 = vmatprep.subr.mxu0 0.0
    %513 = vmatpush1.msra.mxu0 0.0
    %514 = vmatprep.subr.mxu0 0.0
    %515 = vmatpush1.msra.mxu0 0.0
    %516 = vmatprep.subr.mxu0 0.0
    %517 = vmatpush1.msra.mxu0 0.0
    %518 = vmatprep.subr.mxu0 0.0
    %519 = vmatpush1.msra.mxu0 0.0
    %520 = vmatprep.subr.mxu0 0.0
    %521 = vmatpush1.msra.mxu0 0.0
    %522 = vmatprep.subr.mxu0 0.0
    %523 = vmatpush1.msra.mxu0 0.0
    %524 = vmatprep.subr.mxu0 0.0
    %525 = vmatpush1.msra.mxu0 0.0
    %526 = vmatprep.subr.mxu0 0.0
    %527 = vmatpush1.msra.mxu0 0.0
    %528 = vmatprep.subr.mxu0 0.0
    %529 = vmatpush1.msra.mxu0 0.0
    %530 = vmatprep.subr.mxu0 0.0
    %531 = vmatpush1.msra.mxu0 0.0
    %532 = vmatprep.subr.mxu0 0.0
    %533 = vmatpush1.msra.mxu0 0.0
    %534 = vmatprep.subr.mxu0 0.0
    %535 = vmatpush1.msra.mxu0 0.0
    %536 = vmatprep.subr.mxu0 0.0
    %537 = vmatpush1.msra.mxu0 0.0
    %538 = vmatprep.subr.mxu0 0.0
    %539 = vmatpush1.msra.mxu0 0.0
    %540 = vmatprep.subr.mxu0 0.0
    %541 = vmatpush1.msra.mxu0 0.0
    %542 = vmatprep.subr.mxu0 0.0
    %543 = vmatpush1.msra.mxu0 0.0
    %544 = vmatprep.subr.mxu0 0.0
    %545 = vmatpush1.msra.mxu0 0.0
    %546 = vmatprep.subr.mxu0 0.0
    %547 = vmatpush1.msra.mxu0 0.0
    %548 = vmatprep.subr.mxu0 0.0
    %549 = vmatpush1.msra.mxu0 0.0
    %550 = vmatprep.subr.mxu0 0.0
    %551 = vmatpush1.msra.mxu0 0.0
    %552 = vmatprep.subr.mxu0 0.0
    %553 = vmatpush1.msra.mxu0 0.0
    %554 = vmatprep.subr.mxu0 0.0
    %555 = vmatpush1.msra.mxu0 0.0
    %556 = vmatprep.subr.mxu0 0.0
    %557 = vmatpush1.msra.mxu0 0.0
    %558 = vmatprep.subr.mxu0 0.0
    %559 = vmatpush1.msra.mxu0 0.0
    %560 = vmatprep.subr.mxu0 0.0
    %561 = vmatpush1.msra.mxu0 0.0
    %562 = vmatprep.subr.mxu0 0.0
    %563 = vmatpush1.msra.mxu0 0.0
    %564 = vmatprep.subr.mxu0 0.0
    %565 = vmatpush1.msra.mxu0 0.0
    %566 = vmatprep.mubr.f32.mxu0 0.0
    %567 = vmatmul.mubr.f32.gmra.mrb[0].mxu0 %v497
    %v568 = vpop.f32.mrb[0].mxu0
    %v569 = vadd.f32 0.0, %v568
    %v570 = vpop.f32.mrb[0].mxu0
    %571 = vmatprep.mubr.f32.mxu0 0.0
    %572 = vmatmul.mubr.f32.gmra.mrb[0].mxu0 %v500
    %v573 = vpop.f32.mrb[0].mxu0
    %v574 = vadd.f32 0.0, %v573
    %v575 = vpop.f32.mrb[0].mxu0
    %576 = vdwg.mxu0
    %v577 = vadd.f32 %v483, %v569
    %v578 = vadd.f32 %v488, %v574
    %v579 = vld [vmem:[#allocation2 + $0x3] sm:$0xff]
    %v580 = vld [vmem:[#allocation2 + $0x13] sm:$0xff]
    %s581 = scalar_lea.vmem %s3, 48
    %v582 = vld [vmem:[%s581] sm:$0xff]
    %v583 = vld [vmem:[%s581 + $0x8] sm:$0xff]
    %v585 = vsel %vm317, %v579, 0
    %v588 = vsel %vm317, %v580, 0
    %590 = vmatprep.subr.mxu0 0.0
    %591 = vmatpush1.msra.mxu0 %v582
    %592 = vmatprep.subr.mxu0 0.0
    %593 = vmatpush1.msra.mxu0 %v583
    %594 = vmatprep.subr.mxu0 0.0
    %595 = vmatpush1.msra.mxu0 0.0
    %596 = vmatprep.subr.mxu0 0.0
    %597 = vmatpush1.msra.mxu0 0.0
    %598 = vmatprep.subr.mxu0 0.0
    %599 = vmatpush1.msra.mxu0 0.0
    %600 = vmatprep.subr.mxu0 0.0
    %601 = vmatpush1.msra.mxu0 0.0
    %602 = vmatprep.subr.mxu0 0.0
    %603 = vmatpush1.msra.mxu0 0.0
    %604 = vmatprep.subr.mxu0 0.0
    %605 = vmatpush1.msra.mxu0 0.0
    %606 = vmatprep.subr.mxu0 0.0
    %607 = vmatpush1.msra.mxu0 0.0
    %608 = vmatprep.subr.mxu0 0.0
    %609 = vmatpush1.msra.mxu0 0.0
    %610 = vmatprep.subr.mxu0 0.0
    %611 = vmatpush1.msra.mxu0 0.0
    %612 = vmatprep.subr.mxu0 0.0
    %613 = vmatpush1.msra.mxu0 0.0
    %614 = vmatprep.subr.mxu0 0.0
    %615 = vmatpush1.msra.mxu0 0.0
    %616 = vmatprep.subr.mxu0 0.0
    %617 = vmatpush1.msra.mxu0 0.0
    %618 = vmatprep.subr.mxu0 0.0
    %619 = vmatpush1.msra.mxu0 0.0
    %620 = vmatprep.subr.mxu0 0.0
    %621 = vmatpush1.msra.mxu0 0.0
    %622 = vmatprep.subr.mxu0 0.0
    %623 = vmatpush1.msra.mxu0 0.0
    %624 = vmatprep.subr.mxu0 0.0
    %625 = vmatpush1.msra.mxu0 0.0
    %626 = vmatprep.subr.mxu0 0.0
    %627 = vmatpush1.msra.mxu0 0.0
    %628 = vmatprep.subr.mxu0 0.0
    %629 = vmatpush1.msra.mxu0 0.0
    %630 = vmatprep.subr.mxu0 0.0
    %631 = vmatpush1.msra.mxu0 0.0
    %632 = vmatprep.subr.mxu0 0.0
    %633 = vmatpush1.msra.mxu0 0.0
    %634 = vmatprep.subr.mxu0 0.0
    %635 = vmatpush1.msra.mxu0 0.0
    %636 = vmatprep.subr.mxu0 0.0
    %637 = vmatpush1.msra.mxu0 0.0
    %638 = vmatprep.subr.mxu0 0.0
    %639 = vmatpush1.msra.mxu0 0.0
    %640 = vmatprep.subr.mxu0 0.0
    %641 = vmatpush1.msra.mxu0 0.0
    %642 = vmatprep.subr.mxu0 0.0
    %643 = vmatpush1.msra.mxu0 0.0
    %644 = vmatprep.subr.mxu0 0.0
    %645 = vmatpush1.msra.mxu0 0.0
    %646 = vmatprep.subr.mxu0 0.0
    %647 = vmatpush1.msra.mxu0 0.0
    %648 = vmatprep.subr.mxu0 0.0
    %649 = vmatpush1.msra.mxu0 0.0
    %650 = vmatprep.subr.mxu0 0.0
    %651 = vmatpush1.msra.mxu0 0.0
    %652 = vmatprep.subr.mxu0 0.0
    %653 = vmatpush1.msra.mxu0 0.0
    %654 = vmatprep.mubr.f32.mxu0 0.0
    %655 = vmatmul.mubr.f32.gmra.mrb[0].mxu0 %v585
    %v656 = vpop.f32.mrb[0].mxu0
    %v657 = vadd.f32 0.0, %v656
    %v658 = vpop.f32.mrb[0].mxu0
    %659 = vmatprep.mubr.f32.mxu0 0.0
    %660 = vmatmul.mubr.f32.gmra.mrb[0].mxu0 %v588
    %v661 = vpop.f32.mrb[0].mxu0
    %v662 = vadd.f32 0.0, %v661
    %v663 = vpop.f32.mrb[0].mxu0
    %664 = vdwg.mxu0
    %v665 = vadd.f32 %v577, %v657
    %v666 = vadd.f32 %v578, %v662
    %v667 = vld [vmem:[#allocation2 + $0x4] sm:$0xff]
    %v668 = vld [vmem:[#allocation2 + $0x14] sm:$0xff]
    %s669 = scalar_lea.vmem %s3, 64
    %v670 = vld [vmem:[%s669] sm:$0xff]
    %v671 = vld [vmem:[%s669 + $0x8] sm:$0xff]
    %v673 = vsel %vm317, %v667, 0
    %v676 = vsel %vm317, %v668, 0
    %678 = vmatprep.subr.mxu0 0.0
    %679 = vmatpush1.msra.mxu0 %v670
    %680 = vmatprep.subr.mxu0 0.0
    %681 = vmatpush1.msra.mxu0 %v671
    %682 = vmatprep.subr.mxu0 0.0
    %683 = vmatpush1.msra.mxu0 0.0
    %684 = vmatprep.subr.mxu0 0.0
    %685 = vmatpush1.msra.mxu0 0.0
    %686 = vmatprep.subr.mxu0 0.0
    %687 = vmatpush1.msra.mxu0 0.0
    %688 = vmatprep.subr.mxu0 0.0
    %689 = vmatpush1.msra.mxu0 0.0
    %690 = vmatprep.subr.mxu0 0.0
    %691 = vmatpush1.msra.mxu0 0.0
    %692 = vmatprep.subr.mxu0 0.0
    %693 = vmatpush1.msra.mxu0 0.0
    %694 = vmatprep.subr.mxu0 0.0
    %695 = vmatpush1.msra.mxu0 0.0
    %696 = vmatprep.subr.mxu0 0.0
    %697 = vmatpush1.msra.mxu0 0.0
    %698 = vmatprep.subr.mxu0 0.0
    %699 = vmatpush1.msra.mxu0 0.0
    %700 = vmatprep.subr.mxu0 0.0
    %701 = vmatpush1.msra.mxu0 0.0
    %702 = vmatprep.subr.mxu0 0.0
    %703 = vmatpush1.msra.mxu0 0.0
    %704 = vmatprep.subr.mxu0 0.0
    %705 = vmatpush1.msra.mxu0 0.0
    %706 = vmatprep.subr.mxu0 0.0
    %707 = vmatpush1.msra.mxu0 0.0
    %708 = vmatprep.subr.mxu0 0.0
    %709 = vmatpush1.msra.mxu0 0.0
    %710 = vmatprep.subr.mxu0 0.0
    %711 = vmatpush1.msra.mxu0 0.0
    %712 = vmatprep.subr.mxu0 0.0
    %713 = vmatpush1.msra.mxu0 0.0
    %714 = vmatprep.subr.mxu0 0.0
    %715 = vmatpush1.msra.mxu0 0.0
    %716 = vmatprep.subr.mxu0 0.0
    %717 = vmatpush1.msra.mxu0 0.0
    %718 = vmatprep.subr.mxu0 0.0
    %719 = vmatpush1.msra.mxu0 0.0
    %720 = vmatprep.subr.mxu0 0.0
    %721 = vmatpush1.msra.mxu0 0.0
    %722 = vmatprep.subr.mxu0 0.0
    %723 = vmatpush1.msra.mxu0 0.0
    %724 = vmatprep.subr.mxu0 0.0
    %725 = vmatpush1.msra.mxu0 0.0
    %726 = vmatprep.subr.mxu0 0.0
    %727 = vmatpush1.msra.mxu0 0.0
    %728 = vmatprep.subr.mxu0 0.0
    %729 = vmatpush1.msra.mxu0 0.0
    %730 = vmatprep.subr.mxu0 0.0
    %731 = vmatpush1.msra.mxu0 0.0
    %732 = vmatprep.subr.mxu0 0.0
    %733 = vmatpush1.msra.mxu0 0.0
    %734 = vmatprep.subr.mxu0 0.0
    %735 = vmatpush1.msra.mxu0 0.0
    %736 = vmatprep.subr.mxu0 0.0
    %737 = vmatpush1.msra.mxu0 0.0
    %738 = vmatprep.subr.mxu0 0.0
    %739 = vmatpush1.msra.mxu0 0.0
    %740 = vmatprep.subr.mxu0 0.0
    %741 = vmatpush1.msra.mxu0 0.0
    %742 = vmatprep.mubr.f32.mxu0 0.0
    %743 = vmatmul.mubr.f32.gmra.mrb[0].mxu0 %v673
    %v744 = vpop.f32.mrb[0].mxu0
    %v745 = vadd.f32 0.0, %v744
    %v746 = vpop.f32.mrb[0].mxu0
    %747 = vmatprep.mubr.f32.mxu0 0.0
    %748 = vmatmul.mubr.f32.gmra.mrb[0].mxu0 %v676
    %v749 = vpop.f32.mrb[0].mxu0
    %v750 = vadd.f32 0.0, %v749
    %v751 = vpop.f32.mrb[0].mxu0
    %752 = vdwg.mxu0
    %v753 = vadd.f32 %v665, %v745
    %v754 = vadd.f32 %v666, %v750
    %v755 = vld [vmem:[%s1 + $0x3] sm:$0x1]
    %v756 = vlaneseq
    %v757 = vshrl.u32 %v756, 7
    %v758 = vsub.s32 0, %v757
    %v759 = vrot.slane %v755, %v758
    %v760 = vadd.f32 %v753, %v759
    %v761 = vadd.f32 %v754, %v759
    %vm762 = vcmp.gt.f32.partialorder %v760, 0.0
    %vm763 = vcmp.gt.f32.partialorder %v761, 0.0
    %v764 = vmul.f32 %v760, 0.01
    %v765 = vmul.f32 %v761, 0.01
    %v766 = vsel %vm762, %v760, %v764
    %v767 = vsel %vm763, %v761, %v765
    %v768 = vld [vmem:[%s1 + $0x4] sm:$0x1]
    %v769 = vlaneseq
    %v770 = vshrl.u32 %v769, 7
    %v771 = vsub.s32 0, %v770
    %v772 = vrot.slane %v768, %v771
    %v773 = vadd.f32 %v766, %v772
    %v774 = vadd.f32 %v767, %v772
    %vm775 = vcmask 261120
    %776 = vst.msk [vmem:[#allocation2 + $0x2] sm:$0xff] %vm775, %v773
    %777 = vst.msk [vmem:[#allocation2 + $0x12] sm:$0xff] %vm775, %v774
    %v778 = vld [vmem:[#allocation2] sm:$0xff]
    %v779 = vld [vmem:[#allocation2 + $0x10] sm:$0xff]
    %v780 = vld [vmem:[%s4] sm:$0xff]
    %v781 = vld [vmem:[%s4 + $0x8] sm:$0xff]
    %v782 = vld [vmem:[%s4 + $0x10] sm:$0xff]
    %v783 = vld [vmem:[%s4 + $0x18] sm:$0xff]
    %v784 = vld [vmem:[#allocation2 + $0x1] sm:$0xff]
    %v785 = vld [vmem:[#allocation2 + $0x11] sm:$0xff]
    %s786 = scalar_lea.vmem %s4, 32
    %v787 = vld [vmem:[%s786] sm:$0xff]
    %v788 = vld [vmem:[%s786 + $0x8] sm:$0xff]
    %v789 = vld [vmem:[%s786 + $0x10] sm:$0xff]
    %v790 = vld [vmem:[%s786 + $0x18] sm:$0xff]
    %v792 = vsel %vm775, %v784, 0
    %v795 = vsel %vm775, %v785, 0
    %797 = vmatprep.subr.mxu0 0.0
    %798 = vmatpush1.msra.mxu0 %v787
    %799 = vmatprep.subr.mxu0 0.0
    %800 = vmatpush1.msra.mxu0 %v788
    %801 = vmatprep.subr.mxu0 0.0
    %802 = vmatpush1.msra.mxu0 %v789
    %803 = vmatprep.subr.mxu0 0.0
    %804 = vmatpush1.msra.mxu0 %v790
    %805 = vmatprep.subr.mxu0 0.0
    %806 = vmatpush1.msra.mxu0 0.0
    %807 = vmatprep.subr.mxu0 0.0
    %808 = vmatpush1.msra.mxu0 0.0
    %809 = vmatprep.subr.mxu0 0.0
    %810 = vmatpush1.msra.mxu0 0.0
    %811 = vmatprep.subr.mxu0 0.0
    %812 = vmatpush1.msra.mxu0 0.0
    %813 = vmatprep.subr.mxu0 0.0
    %814 = vmatpush1.msra.mxu0 0.0
    %815 = vmatprep.subr.mxu0 0.0
    %816 = vmatpush1.msra.mxu0 0.0
    %817 = vmatprep.subr.mxu0 0.0
    %818 = vmatpush1.msra.mxu0 0.0
    %819 = vmatprep.subr.mxu0 0.0
    %820 = vmatpush1.msra.mxu0 0.0
    %821 = vmatprep.subr.mxu0 0.0
    %822 = vmatpush1.msra.mxu0 0.0
    %823 = vmatprep.subr.mxu0 0.0
    %824 = vmatpush1.msra.mxu0 0.0
    %825 = vmatprep.subr.mxu0 0.0
    %826 = vmatpush1.msra.mxu0 0.0
    %827 = vmatprep.subr.mxu0 0.0
    %828 = vmatpush1.msra.mxu0 0.0
    %829 = vmatprep.subr.mxu0 0.0
    %830 = vmatpush1.msra.mxu0 0.0
    %831 = vmatprep.subr.mxu0 0.0
    %832 = vmatpush1.msra.mxu0 0.0
    %833 = vmatprep.subr.mxu0 0.0
    %834 = vmatpush1.msra.mxu0 0.0
    %835 = vmatprep.subr.mxu0 0.0
    %836 = vmatpush1.msra.mxu0 0.0
    %837 = vmatprep.subr.mxu0 0.0
    %838 = vmatpush1.msra.mxu0 0.0
    %839 = vmatprep.subr.mxu0 0.0
    %840 = vmatpush1.msra.mxu0 0.0
    %841 = vmatprep.subr.mxu0 0.0
    %842 = vmatpush1.msra.mxu0 0.0
    %843 = vmatprep.subr.mxu0 0.0
    %844 = vmatpush1.msra.mxu0 0.0
    %845 = vmatprep.subr.mxu0 0.0
    %846 = vmatpush1.msra.mxu0 0.0
    %847 = vmatprep.subr.mxu0 0.0
    %848 = vmatpush1.msra.mxu0 0.0
    %849 = vmatprep.subr.mxu0 0.0
    %850 = vmatpush1.msra.mxu0 0.0
    %851 = vmatprep.subr.mxu0 0.0
    %852 = vmatpush1.msra.mxu0 0.0
    %853 = vmatprep.subr.mxu0 0.0
    %854 = vmatpush1.msra.mxu0 0.0
    %855 = vmatprep.subr.mxu0 0.0
    %856 = vmatpush1.msra.mxu0 0.0
    %857 = vmatprep.subr.mxu0 0.0
    %858 = vmatpush1.msra.mxu0 0.0
    %859 = vmatprep.subr.mxu0 0.0
    %860 = vmatpush1.msra.mxu0 0.0
    %861 = vmatprep.mubr.f32.mxu0 0.0
    %862 = vmatmul.mubr.f32.gmra.mrb[0].mxu0 %v792
    %v863 = vpop.f32.mrb[0].mxu0
    %v864 = vadd.f32 0.0, %v863
    %v865 = vpop.f32.mrb[0].mxu0
    %866 = vmatprep.mubr.f32.mxu0 0.0
    %867 = vmatmul.mubr.f32.gmra.mrb[0].mxu0 %v795
    %v868 = vpop.f32.mrb[0].mxu0
    %v869 = vadd.f32 0.0, %v868
    %v870 = vpop.f32.mrb[0].mxu0
    %871 = vdwg.mxu0
    %v873 = vsel %vm775, %v778, 0
    %v876 = vsel %vm775, %v779, 0
    %878 = vmatprep.subr.mxu0 0.0
    %879 = vmatpush1.msra.mxu0 %v780
    %880 = vmatprep.subr.mxu0 0.0
    %881 = vmatpush1.msra.mxu0 %v781
    %882 = vmatprep.subr.mxu0 0.0
    %883 = vmatpush1.msra.mxu0 %v782
    %884 = vmatprep.subr.mxu0 0.0
    %885 = vmatpush1.msra.mxu0 %v783
    %886 = vmatprep.subr.mxu0 0.0
    %887 = vmatpush1.msra.mxu0 0.0
    %888 = vmatprep.subr.mxu0 0.0
    %889 = vmatpush1.msra.mxu0 0.0
    %890 = vmatprep.subr.mxu0 0.0
    %891 = vmatpush1.msra.mxu0 0.0
    %892 = vmatprep.subr.mxu0 0.0
    %893 = vmatpush1.msra.mxu0 0.0
    %894 = vmatprep.subr.mxu0 0.0
    %895 = vmatpush1.msra.mxu0 0.0
    %896 = vmatprep.subr.mxu0 0.0
    %897 = vmatpush1.msra.mxu0 0.0
    %898 = vmatprep.subr.mxu0 0.0
    %899 = vmatpush1.msra.mxu0 0.0
    %900 = vmatprep.subr.mxu0 0.0
    %901 = vmatpush1.msra.mxu0 0.0
    %902 = vmatprep.subr.mxu0 0.0
    %903 = vmatpush1.msra.mxu0 0.0
    %904 = vmatprep.subr.mxu0 0.0
    %905 = vmatpush1.msra.mxu0 0.0
    %906 = vmatprep.subr.mxu0 0.0
    %907 = vmatpush1.msra.mxu0 0.0
    %908 = vmatprep.subr.mxu0 0.0
    %909 = vmatpush1.msra.mxu0 0.0
    %910 = vmatprep.subr.mxu0 0.0
    %911 = vmatpush1.msra.mxu0 0.0
    %912 = vmatprep.subr.mxu0 0.0
    %913 = vmatpush1.msra.mxu0 0.0
    %914 = vmatprep.subr.mxu0 0.0
    %915 = vmatpush1.msra.mxu0 0.0
    %916 = vmatprep.subr.mxu0 0.0
    %917 = vmatpush1.msra.mxu0 0.0
    %918 = vmatprep.subr.mxu0 0.0
    %919 = vmatpush1.msra.mxu0 0.0
    %920 = vmatprep.subr.mxu0 0.0
    %921 = vmatpush1.msra.mxu0 0.0
    %922 = vmatprep.subr.mxu0 0.0
    %923 = vmatpush1.msra.mxu0 0.0
    %924 = vmatprep.subr.mxu0 0.0
    %925 = vmatpush1.msra.mxu0 0.0
    %926 = vmatprep.subr.mxu0 0.0
    %927 = vmatpush1.msra.mxu0 0.0
    %928 = vmatprep.subr.mxu0 0.0
    %929 = vmatpush1.msra.mxu0 0.0
    %930 = vmatprep.subr.mxu0 0.0
    %931 = vmatpush1.msra.mxu0 0.0
    %932 = vmatprep.subr.mxu0 0.0
    %933 = vmatpush1.msra.mxu0 0.0
    %934 = vmatprep.subr.mxu0 0.0
    %935 = vmatpush1.msra.mxu0 0.0
    %936 = vmatprep.subr.mxu0 0.0
    %937 = vmatpush1.msra.mxu0 0.0
    %938 = vmatprep.subr.mxu0 0.0
    %939 = vmatpush1.msra.mxu0 0.0
    %940 = vmatprep.subr.mxu0 0.0
    %941 = vmatpush1.msra.mxu0 0.0
    %942 = vmatprep.mubr.f32.mxu0 0.0
    %943 = vmatmul.mubr.f32.gmra.mrb[0].mxu0 %v873
    %v944 = vpop.f32.mrb[0].mxu0
    %v945 = vadd.f32 %v864, %v944
    %v946 = vpop.f32.mrb[0].mxu0
    %947 = vmatprep.mubr.f32.mxu0 0.0
    %948 = vmatmul.mubr.f32.gmra.mrb[0].mxu0 %v876
    %v949 = vpop.f32.mrb[0].mxu0
    %v950 = vadd.f32 %v869, %v949
    %v951 = vpop.f32.mrb[0].mxu0
    %952 = vdwg.mxu0
    %v953 = vld [vmem:[#allocation2 + $0x2] sm:$0xff]
    %v954 = vld [vmem:[#allocation2 + $0x12] sm:$0xff]
    %s955 = scalar_lea.vmem %s4, 64
    %v956 = vld [vmem:[%s955] sm:$0xff]
    %v957 = vld [vmem:[%s955 + $0x8] sm:$0xff]
    %v958 = vld [vmem:[%s955 + $0x10] sm:$0xff]
    %v959 = vld [vmem:[%s955 + $0x18] sm:$0xff]
    %v961 = vsel %vm775, %v953, 0
    %v964 = vsel %vm775, %v954, 0
    %966 = vmatprep.subr.mxu0 0.0
    %967 = vmatpush1.msra.mxu0 %v956
    %968 = vmatprep.subr.mxu0 0.0
    %969 = vmatpush1.msra.mxu0 %v957
    %970 = vmatprep.subr.mxu0 0.0
    %971 = vmatpush1.msra.mxu0 %v958
    %972 = vmatprep.subr.mxu0 0.0
    %973 = vmatpush1.msra.mxu0 %v959
    %974 = vmatprep.subr.mxu0 0.0
    %975 = vmatpush1.msra.mxu0 0.0
    %976 = vmatprep.subr.mxu0 0.0
    %977 = vmatpush1.msra.mxu0 0.0
    %978 = vmatprep.subr.mxu0 0.0
    %979 = vmatpush1.msra.mxu0 0.0
    %980 = vmatprep.subr.mxu0 0.0
    %981 = vmatpush1.msra.mxu0 0.0
    %982 = vmatprep.subr.mxu0 0.0
    %983 = vmatpush1.msra.mxu0 0.0
    %984 = vmatprep.subr.mxu0 0.0
    %985 = vmatpush1.msra.mxu0 0.0
    %986 = vmatprep.subr.mxu0 0.0
    %987 = vmatpush1.msra.mxu0 0.0
    %988 = vmatprep.subr.mxu0 0.0
    %989 = vmatpush1.msra.mxu0 0.0
    %990 = vmatprep.subr.mxu0 0.0
    %991 = vmatpush1.msra.mxu0 0.0
    %992 = vmatprep.subr.mxu0 0.0
    %993 = vmatpush1.msra.mxu0 0.0
    %994 = vmatprep.subr.mxu0 0.0
    %995 = vmatpush1.msra.mxu0 0.0
    %996 = vmatprep.subr.mxu0 0.0
    %997 = vmatpush1.msra.mxu0 0.0
    %998 = vmatprep.subr.mxu0 0.0
    %999 = vmatpush1.msra.mxu0 0.0
    %1000 = vmatprep.subr.mxu0 0.0
    %1001 = vmatpush1.msra.mxu0 0.0
    %1002 = vmatprep.subr.mxu0 0.0
    %1003 = vmatpush1.msra.mxu0 0.0
    %1004 = vmatprep.subr.mxu0 0.0
    %1005 = vmatpush1.msra.mxu0 0.0
    %1006 = vmatprep.subr.mxu0 0.0
    %1007 = vmatpush1.msra.mxu0 0.0
    %1008 = vmatprep.subr.mxu0 0.0
    %1009 = vmatpush1.msra.mxu0 0.0
    %1010 = vmatprep.subr.mxu0 0.0
    %1011 = vmatpush1.msra.mxu0 0.0
    %1012 = vmatprep.subr.mxu0 0.0
    %1013 = vmatpush1.msra.mxu0 0.0
    %1014 = vmatprep.subr.mxu0 0.0
    %1015 = vmatpush1.msra.mxu0 0.0
    %1016 = vmatprep.subr.mxu0 0.0
    %1017 = vmatpush1.msra.mxu0 0.0
    %1018 = vmatprep.subr.mxu0 0.0
    %1019 = vmatpush1.msra.mxu0 0.0
    %1020 = vmatprep.subr.mxu0 0.0
    %1021 = vmatpush1.msra.mxu0 0.0
    %1022 = vmatprep.subr.mxu0 0.0
    %1023 = vmatpush1.msra.mxu0 0.0
    %1024 = vmatprep.subr.mxu0 0.0
    %1025 = vmatpush1.msra.mxu0 0.0
    %1026 = vmatprep.subr.mxu0 0.0
    %1027 = vmatpush1.msra.mxu0 0.0
    %1028 = vmatprep.subr.mxu0 0.0
    %1029 = vmatpush1.msra.mxu0 0.0
    %1030 = vmatprep.mubr.f32.mxu0 0.0
    %1031 = vmatmul.mubr.f32.gmra.mrb[0].mxu0 %v961
    %v1032 = vpop.f32.mrb[0].mxu0
    %v1033 = vadd.f32 0.0, %v1032
    %v1034 = vpop.f32.mrb[0].mxu0
    %1035 = vmatprep.mubr.f32.mxu0 0.0
    %1036 = vmatmul.mubr.f32.gmra.mrb[0].mxu0 %v964
    %v1037 = vpop.f32.mrb[0].mxu0
    %v1038 = vadd.f32 0.0, %v1037
    %v1039 = vpop.f32.mrb[0].mxu0
    %1040 = vdwg.mxu0
    %v1041 = vadd.f32 %v945, %v1033
    %v1042 = vadd.f32 %v950, %v1038
    %v1043 = vld [vmem:[#allocation2 + $0x3] sm:$0xff]
    %v1044 = vld [vmem:[#allocation2 + $0x13] sm:$0xff]
    %s1045 = scalar_lea.vmem %s4, 96
    %v1046 = vld [vmem:[%s1045] sm:$0xff]
    %v1047 = vld [vmem:[%s1045 + $0x8] sm:$0xff]
    %v1048 = vld [vmem:[%s1045 + $0x10] sm:$0xff]
    %v1049 = vld [vmem:[%s1045 + $0x18] sm:$0xff]
    %v1051 = vsel %vm775, %v1043, 0
    %v1054 = vsel %vm775, %v1044, 0
    %1056 = vmatprep.subr.mxu0 0.0
    %1057 = vmatpush1.msra.mxu0 %v1046
    %1058 = vmatprep.subr.mxu0 0.0
    %1059 = vmatpush1.msra.mxu0 %v1047
    %1060 = vmatprep.subr.mxu0 0.0
    %1061 = vmatpush1.msra.mxu0 %v1048
    %1062 = vmatprep.subr.mxu0 0.0
    %1063 = vmatpush1.msra.mxu0 %v1049
    %1064 = vmatprep.subr.mxu0 0.0
    %1065 = vmatpush1.msra.mxu0 0.0
    %1066 = vmatprep.subr.mxu0 0.0
    %1067 = vmatpush1.msra.mxu0 0.0
    %1068 = vmatprep.subr.mxu0 0.0
    %1069 = vmatpush1.msra.mxu0 0.0
    %1070 = vmatprep.subr.mxu0 0.0
    %1071 = vmatpush1.msra.mxu0 0.0
    %1072 = vmatprep.subr.mxu0 0.0
    %1073 = vmatpush1.msra.mxu0 0.0
    %1074 = vmatprep.subr.mxu0 0.0
    %1075 = vmatpush1.msra.mxu0 0.0
    %1076 = vmatprep.subr.mxu0 0.0
    %1077 = vmatpush1.msra.mxu0 0.0
    %1078 = vmatprep.subr.mxu0 0.0
    %1079 = vmatpush1.msra.mxu0 0.0
    %1080 = vmatprep.subr.mxu0 0.0
    %1081 = vmatpush1.msra.mxu0 0.0
    %1082 = vmatprep.subr.mxu0 0.0
    %1083 = vmatpush1.msra.mxu0 0.0
    %1084 = vmatprep.subr.mxu0 0.0
    %1085 = vmatpush1.msra.mxu0 0.0
    %1086 = vmatprep.subr.mxu0 0.0
    %1087 = vmatpush1.msra.mxu0 0.0
    %1088 = vmatprep.subr.mxu0 0.0
    %1089 = vmatpush1.msra.mxu0 0.0
    %1090 = vmatprep.subr.mxu0 0.0
    %1091 = vmatpush1.msra.mxu0 0.0
    %1092 = vmatprep.subr.mxu0 0.0
    %1093 = vmatpush1.msra.mxu0 0.0
    %1094 = vmatprep.subr.mxu0 0.0
    %1095 = vmatpush1.msra.mxu0 0.0
    %1096 = vmatprep.subr.mxu0 0.0
    %1097 = vmatpush1.msra.mxu0 0.0
    %1098 = vmatprep.subr.mxu0 0.0
    %1099 = vmatpush1.msra.mxu0 0.0
    %1100 = vmatprep.subr.mxu0 0.0
    %1101 = vmatpush1.msra.mxu0 0.0
    %1102 = vmatprep.subr.mxu0 0.0
    %1103 = vmatpush1.msra.mxu0 0.0
    %1104 = vmatprep.subr.mxu0 0.0
    %1105 = vmatpush1.msra.mxu0 0.0
    %1106 = vmatprep.subr.mxu0 0.0
    %1107 = vmatpush1.msra.mxu0 0.0
    %1108 = vmatprep.subr.mxu0 0.0
    %1109 = vmatpush1.msra.mxu0 0.0
    %1110 = vmatprep.subr.mxu0 0.0
    %1111 = vmatpush1.msra.mxu0 0.0
    %1112 = vmatprep.subr.mxu0 0.0
    %1113 = vmatpush1.msra.mxu0 0.0
    %1114 = vmatprep.subr.mxu0 0.0
    %1115 = vmatpush1.msra.mxu0 0.0
    %1116 = vmatprep.subr.mxu0 0.0
    %1117 = vmatpush1.msra.mxu0 0.0
    %1118 = vmatprep.subr.mxu0 0.0
    %1119 = vmatpush1.msra.mxu0 0.0
    %1120 = vmatprep.mubr.f32.mxu0 0.0
    %1121 = vmatmul.mubr.f32.gmra.mrb[0].mxu0 %v1051
    %v1122 = vpop.f32.mrb[0].mxu0
    %v1123 = vadd.f32 0.0, %v1122
    %v1124 = vpop.f32.mrb[0].mxu0
    %1125 = vmatprep.mubr.f32.mxu0 0.0
    %1126 = vmatmul.mubr.f32.gmra.mrb[0].mxu0 %v1054
    %v1127 = vpop.f32.mrb[0].mxu0
    %v1128 = vadd.f32 0.0, %v1127
    %v1129 = vpop.f32.mrb[0].mxu0
    %1130 = vdwg.mxu0
    %v1131 = vadd.f32 %v1041, %v1123
    %v1132 = vadd.f32 %v1042, %v1128
    %v1133 = vld [vmem:[#allocation2 + $0x4] sm:$0xff]
    %v1134 = vld [vmem:[#allocation2 + $0x14] sm:$0xff]
    %s1135 = scalar_lea.vmem %s4, 128
    %v1136 = vld [vmem:[%s1135] sm:$0xff]
    %v1137 = vld [vmem:[%s1135 + $0x8] sm:$0xff]
    %v1138 = vld [vmem:[%s1135 + $0x10] sm:$0xff]
    %v1139 = vld [vmem:[%s1135 + $0x18] sm:$0xff]
    %v1141 = vsel %vm775, %v1133, 0
    %v1144 = vsel %vm775, %v1134, 0
    %1146 = vmatprep.subr.mxu0 0.0
    %1147 = vmatpush1.msra.mxu0 %v1136
    %1148 = vmatprep.subr.mxu0 0.0
    %1149 = vmatpush1.msra.mxu0 %v1137
    %1150 = vmatprep.subr.mxu0 0.0
    %1151 = vmatpush1.msra.mxu0 %v1138
    %1152 = vmatprep.subr.mxu0 0.0
    %1153 = vmatpush1.msra.mxu0 %v1139
    %1154 = vmatprep.subr.mxu0 0.0
    %1155 = vmatpush1.msra.mxu0 0.0
    %1156 = vmatprep.subr.mxu0 0.0
    %1157 = vmatpush1.msra.mxu0 0.0
    %1158 = vmatprep.subr.mxu0 0.0
    %1159 = vmatpush1.msra.mxu0 0.0
    %1160 = vmatprep.subr.mxu0 0.0
    %1161 = vmatpush1.msra.mxu0 0.0
    %1162 = vmatprep.subr.mxu0 0.0
    %1163 = vmatpush1.msra.mxu0 0.0
    %1164 = vmatprep.subr.mxu0 0.0
    %1165 = vmatpush1.msra.mxu0 0.0
    %1166 = vmatprep.subr.mxu0 0.0
    %1167 = vmatpush1.msra.mxu0 0.0
    %1168 = vmatprep.subr.mxu0 0.0
    %1169 = vmatpush1.msra.mxu0 0.0
    %1170 = vmatprep.subr.mxu0 0.0
    %1171 = vmatpush1.msra.mxu0 0.0
    %1172 = vmatprep.subr.mxu0 0.0
    %1173 = vmatpush1.msra.mxu0 0.0
    %1174 = vmatprep.subr.mxu0 0.0
    %1175 = vmatpush1.msra.mxu0 0.0
    %1176 = vmatprep.subr.mxu0 0.0
    %1177 = vmatpush1.msra.mxu0 0.0
    %1178 = vmatprep.subr.mxu0 0.0
    %1179 = vmatpush1.msra.mxu0 0.0
    %1180 = vmatprep.subr.mxu0 0.0
    %1181 = vmatpush1.msra.mxu0 0.0
    %1182 = vmatprep.subr.mxu0 0.0
    %1183 = vmatpush1.msra.mxu0 0.0
    %1184 = vmatprep.subr.mxu0 0.0
    %1185 = vmatpush1.msra.mxu0 0.0
    %1186 = vmatprep.subr.mxu0 0.0
    %1187 = vmatpush1.msra.mxu0 0.0
    %1188 = vmatprep.subr.mxu0 0.0
    %1189 = vmatpush1.msra.mxu0 0.0
    %1190 = vmatprep.subr.mxu0 0.0
    %1191 = vmatpush1.msra.mxu0 0.0
    %1192 = vmatprep.subr.mxu0 0.0
    %1193 = vmatpush1.msra.mxu0 0.0
    %1194 = vmatprep.subr.mxu0 0.0
    %1195 = vmatpush1.msra.mxu0 0.0
    %1196 = vmatprep.subr.mxu0 0.0
    %1197 = vmatpush1.msra.mxu0 0.0
    %1198 = vmatprep.subr.mxu0 0.0
    %1199 = vmatpush1.msra.mxu0 0.0
    %1200 = vmatprep.subr.mxu0 0.0
    %1201 = vmatpush1.msra.mxu0 0.0
    %1202 = vmatprep.subr.mxu0 0.0
    %1203 = vmatpush1.msra.mxu0 0.0
    %1204 = vmatprep.subr.mxu0 0.0
    %1205 = vmatpush1.msra.mxu0 0.0
    %1206 = vmatprep.subr.mxu0 0.0
    %1207 = vmatpush1.msra.mxu0 0.0
    %1208 = vmatprep.subr.mxu0 0.0
    %1209 = vmatpush1.msra.mxu0 0.0
    %1210 = vmatprep.mubr.f32.mxu0 0.0
    %1211 = vmatmul.mubr.f32.gmra.mrb[0].mxu0 %v1141
    %v1212 = vpop.f32.mrb[0].mxu0
    %v1213 = vadd.f32 0.0, %v1212
    %v1214 = vpop.f32.mrb[0].mxu0
    %1215 = vmatprep.mubr.f32.mxu0 0.0
    %1216 = vmatmul.mubr.f32.gmra.mrb[0].mxu0 %v1144
    %v1217 = vpop.f32.mrb[0].mxu0
    %v1218 = vadd.f32 0.0, %v1217
    %v1219 = vpop.f32.mrb[0].mxu0
    %1220 = vdwg.mxu0
    %v1221 = vadd.f32 %v1131, %v1213
    %v1222 = vadd.f32 %v1132, %v1218
    %v1223 = vld [vmem:[%s1 + $0x5] sm:$0x1]
    %v1224 = vlaneseq
    %v1225 = vshrl.u32 %v1224, 7
    %v1226 = vsub.s32 0, %v1225
    %v1227 = vrot.slane %v1223, %v1226
    %v1228 = vadd.f32 %v1221, %v1227
    %v1229 = vadd.f32 %v1222, %v1227
    %vm1230 = vcmp.gt.f32.partialorder %v1228, 0.0
    %vm1231 = vcmp.gt.f32.partialorder %v1229, 0.0
    %v1232 = vmul.f32 %v1228, 0.01
    %v1233 = vmul.f32 %v1229, 0.01
    %v1234 = vsel %vm1230, %v1228, %v1232
    %v1235 = vsel %vm1231, %v1229, %v1233
    %v1236 = vld [vmem:[%s1 + $0x6] sm:$0x1]
    %v1237 = vlaneseq
    %v1238 = vshrl.u32 %v1237, 7
    %v1239 = vsub.s32 0, %v1238
    %v1240 = vrot.slane %v1236, %v1239
    %v1241 = vadd.f32 %v1234, %v1240
    %v1242 = vadd.f32 %v1235, %v1240
    %1243 = vst.msk [vmem:[#allocation2 + $0x2] sm:$0xff] %vm317, %v1241
    %1244 = vst.msk [vmem:[#allocation2 + $0x12] sm:$0xff] %vm317, %v1242
    %v1245 = vld [vmem:[#allocation2 + $0x1] sm:$0xff]
    %v1246 = vld [vmem:[#allocation2 + $0x11] sm:$0xff]
    %v1247 = vld [vmem:[%s5] sm:$0xff]
    %v1248 = vld [vmem:[%s5 + $0x8] sm:$0xff]
    %v1249 = vld [vmem:[#allocation2 + $0x2] sm:$0xff]
    %v1250 = vld [vmem:[#allocation2 + $0x12] sm:$0xff]
    %s1251 = scalar_lea.vmem %s5, 16
    %v1252 = vld [vmem:[%s1251] sm:$0xff]
    %v1253 = vld [vmem:[%s1251 + $0x8] sm:$0xff]
    %v1255 = vsel %vm317, %v1249, 0
    %v1258 = vsel %vm317, %v1250, 0
    %1260 = vmatprep.subr.mxu0 0.0
    %1261 = vmatpush1.msra.mxu0 %v1252
    %1262 = vmatprep.subr.mxu0 0.0
    %1263 = vmatpush1.msra.mxu0 %v1253
    %1264 = vmatprep.subr.mxu0 0.0
    %1265 = vmatpush1.msra.mxu0 0.0
    %1266 = vmatprep.subr.mxu0 0.0
    %1267 = vmatpush1.msra.mxu0 0.0
    %1268 = vmatprep.subr.mxu0 0.0
    %1269 = vmatpush1.msra.mxu0 0.0
    %1270 = vmatprep.subr.mxu0 0.0
    %1271 = vmatpush1.msra.mxu0 0.0
    %1272 = vmatprep.subr.mxu0 0.0
    %1273 = vmatpush1.msra.mxu0 0.0
    %1274 = vmatprep.subr.mxu0 0.0
    %1275 = vmatpush1.msra.mxu0 0.0
    %1276 = vmatprep.subr.mxu0 0.0
    %1277 = vmatpush1.msra.mxu0 0.0
    %1278 = vmatprep.subr.mxu0 0.0
    %1279 = vmatpush1.msra.mxu0 0.0
    %1280 = vmatprep.subr.mxu0 0.0
    %1281 = vmatpush1.msra.mxu0 0.0
    %1282 = vmatprep.subr.mxu0 0.0
    %1283 = vmatpush1.msra.mxu0 0.0
    %1284 = vmatprep.subr.mxu0 0.0
    %1285 = vmatpush1.msra.mxu0 0.0
    %1286 = vmatprep.subr.mxu0 0.0
    %1287 = vmatpush1.msra.mxu0 0.0
    %1288 = vmatprep.subr.mxu0 0.0
    %1289 = vmatpush1.msra.mxu0 0.0
    %1290 = vmatprep.subr.mxu0 0.0
    %1291 = vmatpush1.msra.mxu0 0.0
    %1292 = vmatprep.subr.mxu0 0.0
    %1293 = vmatpush1.msra.mxu0 0.0
    %1294 = vmatprep.subr.mxu0 0.0
    %1295 = vmatpush1.msra.mxu0 0.0
    %1296 = vmatprep.subr.mxu0 0.0
    %1297 = vmatpush1.msra.mxu0 0.0
    %1298 = vmatprep.subr.mxu0 0.0
    %1299 = vmatpush1.msra.mxu0 0.0
    %1300 = vmatprep.subr.mxu0 0.0
    %1301 = vmatpush1.msra.mxu0 0.0
    %1302 = vmatprep.subr.mxu0 0.0
    %1303 = vmatpush1.msra.mxu0 0.0
    %1304 = vmatprep.subr.mxu0 0.0
    %1305 = vmatpush1.msra.mxu0 0.0
    %1306 = vmatprep.subr.mxu0 0.0
    %1307 = vmatpush1.msra.mxu0 0.0
    %1308 = vmatprep.subr.mxu0 0.0
    %1309 = vmatpush1.msra.mxu0 0.0
    %1310 = vmatprep.subr.mxu0 0.0
    %1311 = vmatpush1.msra.mxu0 0.0
    %1312 = vmatprep.subr.mxu0 0.0
    %1313 = vmatpush1.msra.mxu0 0.0
    %1314 = vmatprep.subr.mxu0 0.0
    %1315 = vmatpush1.msra.mxu0 0.0
    %1316 = vmatprep.subr.mxu0 0.0
    %1317 = vmatpush1.msra.mxu0 0.0
    %1318 = vmatprep.subr.mxu0 0.0
    %1319 = vmatpush1.msra.mxu0 0.0
    %1320 = vmatprep.subr.mxu0 0.0
    %1321 = vmatpush1.msra.mxu0 0.0
    %1322 = vmatprep.subr.mxu0 0.0
    %1323 = vmatpush1.msra.mxu0 0.0
    %1324 = vmatprep.mubr.f32.mxu0 0.0
    %1325 = vmatmul.mubr.f32.gmra.mrb[0].mxu0 %v1255
    %v1326 = vpop.f32.mrb[0].mxu0
    %v1327 = vadd.f32 0.0, %v1326
    %v1328 = vpop.f32.mrb[0].mxu0
    %1329 = vmatprep.mubr.f32.mxu0 0.0
    %1330 = vmatmul.mubr.f32.gmra.mrb[0].mxu0 %v1258
    %v1331 = vpop.f32.mrb[0].mxu0
    %v1332 = vadd.f32 0.0, %v1331
    %v1333 = vpop.f32.mrb[0].mxu0
    %1334 = vdwg.mxu0
    %v1336 = vsel %vm317, %v1245, 0
    %v1339 = vsel %vm317, %v1246, 0
    %1341 = vmatprep.subr.mxu0 0.0
    %1342 = vmatpush1.msra.mxu0 %v1247
    %1343 = vmatprep.subr.mxu0 0.0
    %1344 = vmatpush1.msra.mxu0 %v1248
    %1345 = vmatprep.subr.mxu0 0.0
    %1346 = vmatpush1.msra.mxu0 0.0
    %1347 = vmatprep.subr.mxu0 0.0
    %1348 = vmatpush1.msra.mxu0 0.0
    %1349 = vmatprep.subr.mxu0 0.0
    %1350 = vmatpush1.msra.mxu0 0.0
    %1351 = vmatprep.subr.mxu0 0.0
    %1352 = vmatpush1.msra.mxu0 0.0
    %1353 = vmatprep.subr.mxu0 0.0
    %1354 = vmatpush1.msra.mxu0 0.0
    %1355 = vmatprep.subr.mxu0 0.0
    %1356 = vmatpush1.msra.mxu0 0.0
    %1357 = vmatprep.subr.mxu0 0.0
    %1358 = vmatpush1.msra.mxu0 0.0
    %1359 = vmatprep.subr.mxu0 0.0
    %1360 = vmatpush1.msra.mxu0 0.0
    %1361 = vmatprep.subr.mxu0 0.0
    %1362 = vmatpush1.msra.mxu0 0.0
    %1363 = vmatprep.subr.mxu0 0.0
    %1364 = vmatpush1.msra.mxu0 0.0
    %1365 = vmatprep.subr.mxu0 0.0
    %1366 = vmatpush1.msra.mxu0 0.0
    %1367 = vmatprep.subr.mxu0 0.0
    %1368 = vmatpush1.msra.mxu0 0.0
    %1369 = vmatprep.subr.mxu0 0.0
    %1370 = vmatpush1.msra.mxu0 0.0
    %1371 = vmatprep.subr.mxu0 0.0
    %1372 = vmatpush1.msra.mxu0 0.0
    %1373 = vmatprep.subr.mxu0 0.0
    %1374 = vmatpush1.msra.mxu0 0.0
    %1375 = vmatprep.subr.mxu0 0.0
    %1376 = vmatpush1.msra.mxu0 0.0
    %1377 = vmatprep.subr.mxu0 0.0
    %1378 = vmatpush1.msra.mxu0 0.0
    %1379 = vmatprep.subr.mxu0 0.0
    %1380 = vmatpush1.msra.mxu0 0.0
    %1381 = vmatprep.subr.mxu0 0.0
    %1382 = vmatpush1.msra.mxu0 0.0
    %1383 = vmatprep.subr.mxu0 0.0
    %1384 = vmatpush1.msra.mxu0 0.0
    %1385 = vmatprep.subr.mxu0 0.0
    %1386 = vmatpush1.msra.mxu0 0.0
    %1387 = vmatprep.subr.mxu0 0.0
    %1388 = vmatpush1.msra.mxu0 0.0
    %1389 = vmatprep.subr.mxu0 0.0
    %1390 = vmatpush1.msra.mxu0 0.0
    %1391 = vmatprep.subr.mxu0 0.0
    %1392 = vmatpush1.msra.mxu0 0.0
    %1393 = vmatprep.subr.mxu0 0.0
    %1394 = vmatpush1.msra.mxu0 0.0
    %1395 = vmatprep.subr.mxu0 0.0
    %1396 = vmatpush1.msra.mxu0 0.0
    %1397 = vmatprep.subr.mxu0 0.0
    %1398 = vmatpush1.msra.mxu0 0.0
    %1399 = vmatprep.subr.mxu0 0.0
    %1400 = vmatpush1.msra.mxu0 0.0
    %1401 = vmatprep.subr.mxu0 0.0
    %1402 = vmatpush1.msra.mxu0 0.0
    %1403 = vmatprep.subr.mxu0 0.0
    %1404 = vmatpush1.msra.mxu0 0.0
    %1405 = vmatprep.mubr.f32.mxu0 0.0
    %1406 = vmatmul.mubr.f32.gmra.mrb[0].mxu0 %v1336
    %v1407 = vpop.f32.mrb[0].mxu0
    %v1408 = vadd.f32 %v1327, %v1407
    %v1409 = vpop.f32.mrb[0].mxu0
    %1410 = vmatprep.mubr.f32.mxu0 0.0
    %1411 = vmatmul.mubr.f32.gmra.mrb[0].mxu0 %v1339
    %v1412 = vpop.f32.mrb[0].mxu0
    %v1413 = vadd.f32 %v1332, %v1412
    %v1414 = vpop.f32.mrb[0].mxu0
    %1415 = vdwg.mxu0
    %v1416 = vld [vmem:[#allocation2 + $0x3] sm:$0xff]
    %v1417 = vld [vmem:[#allocation2 + $0x13] sm:$0xff]
    %s1418 = scalar_lea.vmem %s5, 32
    %v1419 = vld [vmem:[%s1418] sm:$0xff]
    %v1420 = vld [vmem:[%s1418 + $0x8] sm:$0xff]
    %v1422 = vsel %vm317, %v1416, 0
    %v1425 = vsel %vm317, %v1417, 0
    %1427 = vmatprep.subr.mxu0 0.0
    %1428 = vmatpush1.msra.mxu0 %v1419
    %1429 = vmatprep.subr.mxu0 0.0
    %1430 = vmatpush1.msra.mxu0 %v1420
    %1431 = vmatprep.subr.mxu0 0.0
    %1432 = vmatpush1.msra.mxu0 0.0
    %1433 = vmatprep.subr.mxu0 0.0
    %1434 = vmatpush1.msra.mxu0 0.0
    %1435 = vmatprep.subr.mxu0 0.0
    %1436 = vmatpush1.msra.mxu0 0.0
    %1437 = vmatprep.subr.mxu0 0.0
    %1438 = vmatpush1.msra.mxu0 0.0
    %1439 = vmatprep.subr.mxu0 0.0
    %1440 = vmatpush1.msra.mxu0 0.0
    %1441 = vmatprep.subr.mxu0 0.0
    %1442 = vmatpush1.msra.mxu0 0.0
    %1443 = vmatprep.subr.mxu0 0.0
    %1444 = vmatpush1.msra.mxu0 0.0
    %1445 = vmatprep.subr.mxu0 0.0
    %1446 = vmatpush1.msra.mxu0 0.0
    %1447 = vmatprep.subr.mxu0 0.0
    %1448 = vmatpush1.msra.mxu0 0.0
    %1449 = vmatprep.subr.mxu0 0.0
    %1450 = vmatpush1.msra.mxu0 0.0
    %1451 = vmatprep.subr.mxu0 0.0
    %1452 = vmatpush1.msra.mxu0 0.0
    %1453 = vmatprep.subr.mxu0 0.0
    %1454 = vmatpush1.msra.mxu0 0.0
    %1455 = vmatprep.subr.mxu0 0.0
    %1456 = vmatpush1.msra.mxu0 0.0
    %1457 = vmatprep.subr.mxu0 0.0
    %1458 = vmatpush1.msra.mxu0 0.0
    %1459 = vmatprep.subr.mxu0 0.0
    %1460 = vmatpush1.msra.mxu0 0.0
    %1461 = vmatprep.subr.mxu0 0.0
    %1462 = vmatpush1.msra.mxu0 0.0
    %1463 = vmatprep.subr.mxu0 0.0
    %1464 = vmatpush1.msra.mxu0 0.0
    %1465 = vmatprep.subr.mxu0 0.0
    %1466 = vmatpush1.msra.mxu0 0.0
    %1467 = vmatprep.subr.mxu0 0.0
    %1468 = vmatpush1.msra.mxu0 0.0
    %1469 = vmatprep.subr.mxu0 0.0
    %1470 = vmatpush1.msra.mxu0 0.0
    %1471 = vmatprep.subr.mxu0 0.0
    %1472 = vmatpush1.msra.mxu0 0.0
    %1473 = vmatprep.subr.mxu0 0.0
    %1474 = vmatpush1.msra.mxu0 0.0
    %1475 = vmatprep.subr.mxu0 0.0
    %1476 = vmatpush1.msra.mxu0 0.0
    %1477 = vmatprep.subr.mxu0 0.0
    %1478 = vmatpush1.msra.mxu0 0.0
    %1479 = vmatprep.subr.mxu0 0.0
    %1480 = vmatpush1.msra.mxu0 0.0
    %1481 = vmatprep.subr.mxu0 0.0
    %1482 = vmatpush1.msra.mxu0 0.0
    %1483 = vmatprep.subr.mxu0 0.0
    %1484 = vmatpush1.msra.mxu0 0.0
    %1485 = vmatprep.subr.mxu0 0.0
    %1486 = vmatpush1.msra.mxu0 0.0
    %1487 = vmatprep.subr.mxu0 0.0
    %1488 = vmatpush1.msra.mxu0 0.0
    %1489 = vmatprep.subr.mxu0 0.0
    %1490 = vmatpush1.msra.mxu0 0.0
    %1491 = vmatprep.mubr.f32.mxu0 0.0
    %1492 = vmatmul.mubr.f32.gmra.mrb[0].mxu0 %v1422
    %v1493 = vpop.f32.mrb[0].mxu0
    %v1494 = vadd.f32 0.0, %v1493
    %v1495 = vpop.f32.mrb[0].mxu0
    %1496 = vmatprep.mubr.f32.mxu0 0.0
    %1497 = vmatmul.mubr.f32.gmra.mrb[0].mxu0 %v1425
    %v1498 = vpop.f32.mrb[0].mxu0
    %v1499 = vadd.f32 0.0, %v1498
    %v1500 = vpop.f32.mrb[0].mxu0
    %1501 = vdwg.mxu0
    %v1502 = vadd.f32 %v1408, %v1494
    %v1503 = vadd.f32 %v1413, %v1499
    %v1504 = vld [vmem:[%s1 + $0x7] sm:$0x1]
    %v1505 = vlaneseq
    %v1506 = vshrl.u32 %v1505, 7
    %v1507 = vsub.s32 0, %v1506
    %v1508 = vrot.slane %v1504, %v1507
    %v1509 = vadd.f32 %v1502, %v1508
    %v1510 = vadd.f32 %v1503, %v1508
    %vm1511 = vcmask 31744
    %v1512 = vsel %vm1511, %v1509, 0.0
    %v1513 = vrot.slane %v1512, 4
    %v1514 = vadd.f32 %v1512, %v1513
    %v1515 = vrot.slane %v1514, 2
    %v1516 = vadd.f32 %v1514, %v1515
    %v1517 = vrot.slane %v1516, 1
    %v1518 = vadd.f32 %v1516, %v1517
    %v1519 = vsel %vm1511, %v1510, 0.0
    %v1520 = vrot.slane %v1519, 4
    %v1521 = vadd.f32 %v1519, %v1520
    %v1522 = vrot.slane %v1521, 2
    %v1523 = vadd.f32 %v1521, %v1522
    %v1524 = vrot.slane %v1523, 1
    %v1525 = vadd.f32 %v1523, %v1524
    %v1526 = vrcp.pop 8.0
    %v1527 = vmul.f32 %v1518, %v1526
    %v1528 = vmul.f32 %v1525, %v1526
    %vm1531 = vcmask 1041409
    %v1532 = vsel %vm1531, %v1528, %v1527
    %vm1534 = vcmask 25600
    %1535 = vst.msk [vmem:[#allocation3] sm:$0x3] %vm1534, %v1532
    // Predicated region
    $region26: #{tpu_custom_call.1} parent=1 // pred_check
      _
    $region27: #{tpu_custom_call.1} parent=1 // pred_check_branch
      %1537 = sbr.rel (0) target = $region29
    $region28: #{tpu_custom_call.1} parent=1 // pred_region
      %s1539 = ssub.s32 32, 32
      %1540 = vsyncadd [#allocation4], %s1539
      %s1542 = sshll.u32 [#allocation3], 4
      %s1543 = int_to_ptr.vmem [resolvable:$true] %s1542
      %1545 = dma.vmem_to_hbm [thread:$0]  %s1543, 32, %s6, [#allocation4]
    $region29: #{tpu_custom_call.1} parent=1 // pred_fallthru
      _
    // Predicated region
    $region30: #{tpu_custom_call.1} parent=1 // pred_check
      _
    $region31: #{tpu_custom_call.1} parent=1 // pred_check_branch
      %1547 = sbr.rel (0) target = $region33
    $region32: #{tpu_custom_call.1} parent=1 // pred_region
      %1548 = dma.done [#allocation4], 32
    $region33: #{tpu_custom_call.1} parent=1 // pred_fallthru
      _
    %1549 = vsyncpa [#allocation4], 1

</llo_original>
